<compile_context>
chip_gen: v6e
topology: v6e:2x2x1
jax: 0.10.0
libtpu: 0.0.40
codegen_flags: <defaults>
</compile_context>

<pallas_src>
import math
import numpy as np
import jax
import jax.numpy as jnp
from jax import lax
from jax.experimental import pallas as pl
from jax.experimental.pallas import tpu as pltpu

# ----- hyperparameters (small, consistent with the module's constraints) -----
DIM = 8                         # dim
HEAD_DIM = 4                    # head_dim
NUM_HEADS = 4                   # num_heads  (head_dim*num_heads == 2*dim, required by qs/ks)
P = 4                           # num_patch
N = P * P                       # sequence length
PATCH_SIZE = 4                  # stored but unused in forward
INNER = HEAD_DIM * NUM_HEADS    # 16
CPG = (3 * INNER) // DIM        # grouped-conv output channels per group = 6
H2 = NUM_HEADS // 2             # heads used by the softmax-attention branch
SCALE = HEAD_DIM ** (-0.5)
EPS = 1e-5
BATCH = 2


# ------------------------------- fused kernel ---------------------------------
def _fused_attention_conv_kernel(x_ref, bn_ref, wcols_ref, wconv_ref, out_ref):
    """Whole Attention_Conv forward (all batches) in a single grid step.

    x_ref:     (B, DIM, N)   tokens raw-viewed as NCHW, spatial flattened
    bn_ref:    (DIM, 2)      [gamma | beta]
    wcols_ref: (N, 3)        per-token grouped-qkv weights [w_q | w_k | w_v]
    wconv_ref: (6, N, DIM)   depthwise conv tap maps in (token t, u) coords with
                             zero-padding boundary masks folded in:
                             [qs_tap0, qs_tap1, qs_tap2, ks_tap0, ks_tap1, ks_tap2]
    out_ref:   (B, N, DIM)   final output
    """
    bsz = x_ref.shape[0]

    # ---- BatchNorm2d batch statistics (per channel, biased variance) ----
    inv_cnt = 1.0 / float(bsz * N)
    ssum = jnp.zeros((DIM, 1), jnp.float32)
    for b in range(bsz):
        ssum = ssum + jnp.sum(x_ref[b], axis=1, keepdims=True)
    mean = ssum * inv_cnt
    vsum = jnp.zeros((DIM, 1), jnp.float32)
    for b in range(bsz):
        d = x_ref[b] - mean
        vsum = vsum + jnp.sum(d * d, axis=1, keepdims=True)
    var = vsum * inv_cnt

    gamma = bn_ref[:, 0:1]
    beta = bn_ref[:, 1:2]
    scl = gamma * lax.rsqrt(var + EPS)          # (DIM, 1)
    sft = beta - mean * scl                     # (DIM, 1)

    # per-token qkv weights (grouped 1x1 conv collapses to these per-token scalars)
    wq = wcols_ref[:, 0:1]                      # (N, 1)
    wk = wcols_ref[:, 1:2]
    wv = wcols_ref[:, 2:3]

    # depthwise conv tap maps (boundary masks already folded in)
    wqs0 = wconv_ref[0]
    wqs1 = wconv_ref[1]
    wqs2 = wconv_ref[2]
    wks0 = wconv_ref[3]
    wks1 = wconv_ref[4]
    wks2 = wconv_ref[5]

    z_row = jnp.zeros((1, DIM), jnp.float32)
    z_col = jnp.zeros((N, 1), jnp.float32)

    for b in range(bsz):
        # BN affine + ReLU
        yb = jnp.maximum(x_ref[b] * scl + sft, 0.0)               # (DIM, N)

        # token-major copy of the activations: token t reads input channel t//2
        # (this reproduces the PyTorch raw view + grouped-conv channel mapping)
        y_tok = jnp.concatenate(
            [yb[t // 2:t // 2 + 1, :] for t in range(N)], axis=0)  # (N, N)

        qh = y_tok * wq                                            # q[b, t, s]
        kh = y_tok * wk
        vh = y_tok * wv

        # ---------- softmax-attention branch (heads 0 .. H2-1) ----------
        head_outs = []
        for h in range(H2):
            sl = slice(HEAD_DIM * h, HEAD_DIM * (h + 1))
            q1 = qh[:, sl]                                         # (N, HEAD_DIM)
            k1 = kh[:, sl]
            v1 = vh[:, sl]
            s = lax.dot_general(q1, k1, (((1,), (1,)), ((), ())),
                                preferred_element_type=jnp.float32) * SCALE
            s = s - jnp.max(s, axis=-1, keepdims=True)
            p = jnp.exp(s)
            p = p / jnp.sum(p, axis=-1, keepdims=True)
            head_outs.append(jnp.dot(p, v1, preferred_element_type=jnp.float32))
        attn_out = jnp.concatenate(head_outs, axis=1)              # (N, DIM)

        # ---------- depthwise conv branch (heads H2 .. NUM_HEADS-1) ----------
        # In (token t, u) coordinates: q2_img[c, i, j] == Q2[t, u] with
        # c = 4*(u//4) + t//4, i = t%4, j = u%4.
        Q2 = qh[:, DIM:2 * DIM]                                    # (N, DIM)
        K2 = kh[:, DIM:2 * DIM]
        V2 = vh[:, DIM:2 * DIM]
        Q2l = jnp.concatenate([z_col, Q2[:, :DIM - 1]], axis=1)    # shift left  (j-1)
        Q2r = jnp.concatenate([Q2[:, 1:], z_col], axis=1)          # shift right (j+1)
        K2u = jnp.concatenate([z_row, K2[:N - 1, :]], axis=0)      # shift up    (i-1)
        K2d = jnp.concatenate([K2[1:, :], z_row], axis=0)          # shift down  (i+1)
        q2c = wqs0 * Q2l + wqs1 * Q2 + wqs2 * Q2r
        k2c = wks0 * K2u + wks1 * K2 + wks2 * K2d
        out2 = q2c + k2c + V2                                      # (N, DIM), (t,u) coords

        # raw torch view (b, DIM, P, P) -> (b, N, DIM):
        # res2[n, :] mixes even/odd token rows of out2 (column blocks of P)
        ev = jnp.concatenate([out2[t:t + 1, :] for t in range(0, N, 2)], axis=0)  # (N//2, DIM)
        od = jnp.concatenate([out2[t:t + 1, :] for t in range(1, N, 2)], axis=0)  # (N//2, DIM)
        res2 = jnp.concatenate(
            [jnp.concatenate([ev[:, 0:P], od[:, 0:P]], axis=1),
             jnp.concatenate([ev[:, P:2 * P], od[:, P:2 * P]], axis=1)],
            axis=0)                                                # (N, DIM)

        # cat([attn_out, res2]) + AdaptiveAvgPool1d(2*DIM -> DIM)
        # == mean of adjacent column pairs
        full = jnp.concatenate([attn_out, res2], axis=1)           # (N, 2*DIM)
        out_b = jnp.concatenate(
            [0.5 * (full[:, 2 * m:2 * m + 1] + full[:, 2 * m + 1:2 * m + 2])
             for m in range(DIM)], axis=1)                         # (N, DIM)

        out_ref[b, :, :] = out_b


# ------------------------------ forward pass ----------------------------------
def attention_conv_forward(x, params):
    b, n, d = x.shape
    assert n == N and d == DIM

    # raw `view` (b, n, d) -> (b, dim, P, P) exactly as in the PyTorch module;
    # spatial flattened -> (b, DIM, N).
    x3 = x.reshape(b, DIM, N).astype(jnp.float32)

    # ---- repack the tiny parameter tensors (weights only; done once per call) ----
    t_idx = np.arange(N)
    w_qkv = params["w_qkv"].astype(jnp.float32)                    # (3*INNER,)
    wcols = jnp.stack([w_qkv[3 * t_idx],
                       w_qkv[3 * t_idx + 1],
                       w_qkv[3 * t_idx + 2]], axis=1)              # (N, 3)

    tt = np.arange(N)[:, None]          # token index t
    uu = np.arange(DIM)[None, :]        # u index within the branch-2 half
    ch = 4 * (uu // 4) + tt // 4        # depthwise conv channel per (t, u)
    mask_u0 = (uu % 4 != 0).astype(np.float32)    # left-tap valid  (j-1 exists)
    mask_u3 = (uu % 4 != 3).astype(np.float32)    # right-tap valid (j+1 exists)
    mask_t0 = (tt % 4 != 0).astype(np.float32)    # up-tap valid    (i-1 exists)
    mask_t3 = (tt % 4 != 3).astype(np.float32)    # down-tap valid  (i+1 exists)
    qs_map = params["w_qs"].astype(jnp.float32)[ch]                # (N, DIM, 3)
    ks_map = params["w_ks"].astype(jnp.float32)[ch]                # (N, DIM, 3)
    wconv = jnp.stack([qs_map[..., 0] * mask_u0,
                       qs_map[..., 1],
                       qs_map[..., 2] * mask_u3,
                       ks_map[..., 0] * mask_t0,
                       ks_map[..., 1],
                       ks_map[..., 2] * mask_t3], axis=0)          # (6, N, DIM)

    bnp = jnp.stack([params["gamma"].astype(jnp.float32),
                     params["beta"].astype(jnp.float32)], axis=1)  # (DIM, 2)

    out = pl.pallas_call(
        _fused_attention_conv_kernel,
        out_shape=jax.ShapeDtypeStruct((b, N, DIM), jnp.float32),
        grid=(1,),
        in_specs=[
            pl.BlockSpec((b, DIM, N), lambda i: (0, 0, 0)),
            pl.BlockSpec((DIM, 2), lambda i: (0, 0)),
            pl.BlockSpec((N, 3), lambda i: (0, 0)),
            pl.BlockSpec((6, N, DIM), lambda i: (0, 0, 0)),
        ],
        out_specs=pl.BlockSpec((b, N, DIM), lambda i: (0, 0, 0)),
        compiler_params=pltpu.CompilerParams(dimension_semantics=("arbitrary",)),
    )(x3, bnp, wcols, wconv)
    return out


# ----------------------------- pure-JAX reference -----------------------------
def reference_forward(x, params):
    b = x.shape[0]
    x_img = x.reshape(b, DIM, P, P)
    mean = jnp.mean(x_img, axis=(0, 2, 3), keepdims=True)
    var = jnp.mean(jnp.square(x_img - mean), axis=(0, 2, 3), keepdims=True)
    y = (x_img - mean) * lax.rsqrt(var + EPS)
    y = y * params["gamma"][None, :, None, None] + params["beta"][None, :, None, None]
    y = jnp.maximum(y, 0.0)
    dn = ("NCHW", "OIHW", "NCHW")
    qkv = lax.conv_general_dilated(y, params["w_qkv"].reshape(3 * INNER, 1, 1, 1),
                                   (1, 1), [(0, 0), (0, 0)],
                                   feature_group_count=DIM, dimension_numbers=dn)
    qkv = qkv.reshape(b, N, 3 * INNER)
    q, k, v = jnp.split(qkv, 3, axis=-1)

    def to_heads(t):
        return t.reshape(b, N, NUM_HEADS, HEAD_DIM).transpose(0, 2, 1, 3)

    q, k, v = to_heads(q), to_heads(k), to_heads(v)
    q1, k1, v1 = q[:, :H2], k[:, :H2], v[:, :H2]
    q2 = q[:, H2:].reshape(b, DIM, P, P)
    k2 = k[:, H2:].reshape(b, DIM, P, P)
    v2 = v[:, H2:].reshape(b, DIM, P, P)
    q2c = lax.conv_general_dilated(q2, params["w_qs"].reshape(DIM, 1, 1, 3),
                                   (1, 1), [(0, 0), (1, 1)],
                                   feature_group_count=DIM, dimension_numbers=dn)
    k2c = lax.conv_general_dilated(k2, params["w_ks"].reshape(DIM, 1, 3, 1),
                                   (1, 1), [(1, 1), (0, 0)],
                                   feature_group_count=DIM, dimension_numbers=dn)
    res2 = (q2c + k2c + v2).reshape(b, N, DIM)
    scores = jnp.einsum("bhid,bhjd->bhij", q1, k1) * SCALE
    attn = jax.nn.softmax(scores, axis=-1)
    out = jnp.einsum("bhij,bhjd->bhid", attn, v1)
    out = out.transpose(0, 2, 1, 3).reshape(b, N, DIM)
    res = jnp.concatenate([out, res2], axis=2)
    return 0.5 * (res[:, :, 0::2] + res[:, :, 1::2])


# ---------------------------------- main --------------------------------------
if __name__ == "__main__":
    key = jax.random.PRNGKey(0)
    kx, kg, kb, kqkv, kqs, kks = jax.random.split(key, 6)
    x = jax.random.normal(kx, (BATCH, N, DIM), dtype=jnp.float32)
    params = {
        # BatchNorm2d affine params (PyTorch default is gamma=1, beta=0; add
        # small deterministic perturbations to make the test non-trivial)
        "gamma": 1.0 + 0.1 * jax.random.normal(kg, (DIM,), dtype=jnp.float32),
        "beta": 0.1 * jax.random.normal(kb, (DIM,), dtype=jnp.float32),
        # qkv: Conv2d(dim, 3*inner, 1, groups=dim) weight (3*inner, 1, 1, 1) flattened
        "w_qkv": jax.random.normal(kqkv, (3 * INNER,), dtype=jnp.float32),
        # qs: Conv2d(dim, dim, (1,3), groups=dim) weight (dim, 1, 1, 3) -> (dim, 3)
        "w_qs": jax.random.normal(kqs, (DIM, 3), dtype=jnp.float32) / math.sqrt(3.0),
        # ks: Conv2d(dim, dim, (3,1), groups=dim) weight (dim, 1, 3, 1) -> (dim, 3)
        "w_ks": jax.random.normal(kks, (DIM, 3), dtype=jnp.float32) / math.sqrt(3.0),
    }

    out = jax.block_until_ready(attention_conv_forward(x, params))
    ref = jax.block_until_ready(reference_forward(x, params))
    assert out.shape == (BATCH, N, DIM)
    np.testing.assert_allclose(np.asarray(out), np.asarray(ref), rtol=1e-4, atol=1e-4)
    print("KERNEL_OK")
</pallas_src>

<mosaic_0001>
module attributes {stable_mosaic.version = 11 : i64} {
  func.func @_fused_attention_conv_kernel(%arg0: i32, %arg1: memref<2x8x16xf32, #tpu.memory_space<vmem>>, %arg2: memref<8x2xf32, #tpu.memory_space<vmem>>, %arg3: memref<16x3xf32, #tpu.memory_space<vmem>>, %arg4: memref<6x16x8xf32, #tpu.memory_space<vmem>>, %arg5: memref<2x16x8xf32, #tpu.memory_space<vmem>>) attributes {dimension_semantics = [#tpu.dimension_semantics<arbitrary>], iteration_bounds = array<i64: 1>, scalar_prefetch = 0 : i64, scratch_operands = 0 : i64, tpu.core_type = #tpu.core_type<tc>, window_params = [{pipeline_mode = #tpu.pipeline_mode<synchronous>, transform_indices = @transform_0, window_bounds = array<i64: 2, 8, 16>}, {pipeline_mode = #tpu.pipeline_mode<synchronous>, transform_indices = @transform_1, window_bounds = array<i64: 8, 2>}, {pipeline_mode = #tpu.pipeline_mode<synchronous>, transform_indices = @transform_2, window_bounds = array<i64: 16, 3>}, {pipeline_mode = #tpu.pipeline_mode<synchronous>, transform_indices = @transform_3, window_bounds = array<i64: 6, 16, 8>}, {pipeline_mode = #tpu.pipeline_mode<synchronous>, transform_indices = @transform_4, window_bounds = array<i64: 2, 16, 8>}]} {
    %cst = arith.constant 0.000000e+00 : f32
    %0 = vector.broadcast %cst : f32 to vector<8x1xf32>
    %c0 = arith.constant 0 : index
    %c0_0 = arith.constant 0 : index
    %c0_1 = arith.constant 0 : index
    %1 = vector.load %arg1[%c0, %c0_0, %c0_1] : memref<2x8x16xf32, #tpu.memory_space<vmem>>, vector<1x8x16xf32>
    %2 = vector.shape_cast %1 : vector<1x8x16xf32> to vector<8x16xf32>
    %cst_2 = arith.constant dense<0.000000e+00> : vector<8xf32>
    %3 = vector.multi_reduction <add>, %2, %cst_2 [1] : vector<8x16xf32> to vector<8xf32>
    %4 = vector.shape_cast %3 : vector<8xf32> to vector<8x1xf32>
    %5 = arith.addf %0, %4 : vector<8x1xf32>
    %c1 = arith.constant 1 : index
    %c0_3 = arith.constant 0 : index
    %c0_4 = arith.constant 0 : index
    %6 = vector.load %arg1[%c1, %c0_3, %c0_4] : memref<2x8x16xf32, #tpu.memory_space<vmem>>, vector<1x8x16xf32>
    %7 = vector.shape_cast %6 : vector<1x8x16xf32> to vector<8x16xf32>
    %cst_5 = arith.constant dense<0.000000e+00> : vector<8xf32>
    %8 = vector.multi_reduction <add>, %7, %cst_5 [1] : vector<8x16xf32> to vector<8xf32>
    %9 = vector.shape_cast %8 : vector<8xf32> to vector<8x1xf32>
    %10 = arith.addf %5, %9 : vector<8x1xf32>
    %cst_6 = arith.constant 3.125000e-02 : f32
    %11 = vector.broadcast %cst_6 : f32 to vector<8x1xf32>
    %12 = arith.mulf %10, %11 : vector<8x1xf32>
    %cst_7 = arith.constant 0.000000e+00 : f32
    %13 = vector.broadcast %cst_7 : f32 to vector<8x1xf32>
    %c0_8 = arith.constant 0 : index
    %c0_9 = arith.constant 0 : index
    %c0_10 = arith.constant 0 : index
    %14 = vector.load %arg1[%c0_8, %c0_9, %c0_10] : memref<2x8x16xf32, #tpu.memory_space<vmem>>, vector<1x8x16xf32>
    %15 = vector.shape_cast %14 : vector<1x8x16xf32> to vector<8x16xf32>
    %16 = vector.broadcast %12 : vector<8x1xf32> to vector<8x16xf32>
    %17 = arith.subf %15, %16 : vector<8x16xf32>
    %18 = arith.mulf %17, %17 : vector<8x16xf32>
    %cst_11 = arith.constant dense<0.000000e+00> : vector<8xf32>
    %19 = vector.multi_reduction <add>, %18, %cst_11 [1] : vector<8x16xf32> to vector<8xf32>
    %20 = vector.shape_cast %19 : vector<8xf32> to vector<8x1xf32>
    %21 = arith.addf %13, %20 : vector<8x1xf32>
    %c1_12 = arith.constant 1 : index
    %c0_13 = arith.constant 0 : index
    %c0_14 = arith.constant 0 : index
    %22 = vector.load %arg1[%c1_12, %c0_13, %c0_14] : memref<2x8x16xf32, #tpu.memory_space<vmem>>, vector<1x8x16xf32>
    %23 = vector.shape_cast %22 : vector<1x8x16xf32> to vector<8x16xf32>
    %24 = vector.broadcast %12 : vector<8x1xf32> to vector<8x16xf32>
    %25 = arith.subf %23, %24 : vector<8x16xf32>
    %26 = arith.mulf %25, %25 : vector<8x16xf32>
    %cst_15 = arith.constant dense<0.000000e+00> : vector<8xf32>
    %27 = vector.multi_reduction <add>, %26, %cst_15 [1] : vector<8x16xf32> to vector<8xf32>
    %28 = vector.shape_cast %27 : vector<8xf32> to vector<8x1xf32>
    %29 = arith.addf %21, %28 : vector<8x1xf32>
    %cst_16 = arith.constant 3.125000e-02 : f32
    %30 = vector.broadcast %cst_16 : f32 to vector<8x1xf32>
    %31 = arith.mulf %29, %30 : vector<8x1xf32>
    %c0_17 = arith.constant 0 : index
    %c0_18 = arith.constant 0 : index
    %32 = vector.load %arg2[%c0_17, %c0_18] : memref<8x2xf32, #tpu.memory_space<vmem>>, vector<8x1xf32>
    %c0_19 = arith.constant 0 : index
    %c1_20 = arith.constant 1 : index
    %33 = vector.load %arg2[%c0_19, %c1_20] : memref<8x2xf32, #tpu.memory_space<vmem>>, vector<8x1xf32>
    %cst_21 = arith.constant 9.99999974E-6 : f32
    %34 = vector.broadcast %cst_21 : f32 to vector<8x1xf32>
    %35 = arith.addf %31, %34 : vector<8x1xf32>
    %36 = math.rsqrt %35 : vector<8x1xf32>
    %37 = arith.mulf %32, %36 : vector<8x1xf32>
    %38 = arith.mulf %12, %37 : vector<8x1xf32>
    %39 = arith.subf %33, %38 : vector<8x1xf32>
    %c0_22 = arith.constant 0 : index
    %c0_23 = arith.constant 0 : index
    %40 = vector.load %arg3[%c0_22, %c0_23] : memref<16x3xf32, #tpu.memory_space<vmem>>, vector<16x1xf32>
    %c0_24 = arith.constant 0 : index
    %c1_25 = arith.constant 1 : index
    %41 = vector.load %arg3[%c0_24, %c1_25] : memref<16x3xf32, #tpu.memory_space<vmem>>, vector<16x1xf32>
    %c0_26 = arith.constant 0 : index
    %c2 = arith.constant 2 : index
    %42 = vector.load %arg3[%c0_26, %c2] : memref<16x3xf32, #tpu.memory_space<vmem>>, vector<16x1xf32>
    %c0_27 = arith.constant 0 : index
    %c0_28 = arith.constant 0 : index
    %c0_29 = arith.constant 0 : index
    %43 = vector.load %arg4[%c0_27, %c0_28, %c0_29] : memref<6x16x8xf32, #tpu.memory_space<vmem>>, vector<1x16x8xf32>
    %44 = vector.shape_cast %43 : vector<1x16x8xf32> to vector<16x8xf32>
    %c1_30 = arith.constant 1 : index
    %c0_31 = arith.constant 0 : index
    %c0_32 = arith.constant 0 : index
    %45 = vector.load %arg4[%c1_30, %c0_31, %c0_32] : memref<6x16x8xf32, #tpu.memory_space<vmem>>, vector<1x16x8xf32>
    %46 = vector.shape_cast %45 : vector<1x16x8xf32> to vector<16x8xf32>
    %c2_33 = arith.constant 2 : index
    %c0_34 = arith.constant 0 : index
    %c0_35 = arith.constant 0 : index
    %47 = vector.load %arg4[%c2_33, %c0_34, %c0_35] : memref<6x16x8xf32, #tpu.memory_space<vmem>>, vector<1x16x8xf32>
    %48 = vector.shape_cast %47 : vector<1x16x8xf32> to vector<16x8xf32>
    %c3 = arith.constant 3 : index
    %c0_36 = arith.constant 0 : index
    %c0_37 = arith.constant 0 : index
    %49 = vector.load %arg4[%c3, %c0_36, %c0_37] : memref<6x16x8xf32, #tpu.memory_space<vmem>>, vector<1x16x8xf32>
    %50 = vector.shape_cast %49 : vector<1x16x8xf32> to vector<16x8xf32>
    %c4 = arith.constant 4 : index
    %c0_38 = arith.constant 0 : index
    %c0_39 = arith.constant 0 : index
    %51 = vector.load %arg4[%c4, %c0_38, %c0_39] : memref<6x16x8xf32, #tpu.memory_space<vmem>>, vector<1x16x8xf32>
    %52 = vector.shape_cast %51 : vector<1x16x8xf32> to vector<16x8xf32>
    %c5 = arith.constant 5 : index
    %c0_40 = arith.constant 0 : index
    %c0_41 = arith.constant 0 : index
    %53 = vector.load %arg4[%c5, %c0_40, %c0_41] : memref<6x16x8xf32, #tpu.memory_space<vmem>>, vector<1x16x8xf32>
    %54 = vector.shape_cast %53 : vector<1x16x8xf32> to vector<16x8xf32>
    %cst_42 = arith.constant 0.000000e+00 : f32
    %55 = vector.broadcast %cst_42 : f32 to vector<1x8xf32>
    %cst_43 = arith.constant 0.000000e+00 : f32
    %56 = vector.broadcast %cst_43 : f32 to vector<16x1xf32>
    %c0_44 = arith.constant 0 : index
    %c0_45 = arith.constant 0 : index
    %c0_46 = arith.constant 0 : index
    %57 = vector.load %arg1[%c0_44, %c0_45, %c0_46] : memref<2x8x16xf32, #tpu.memory_space<vmem>>, vector<1x8x16xf32>
    %58 = vector.shape_cast %57 : vector<1x8x16xf32> to vector<8x16xf32>
    %59 = vector.broadcast %37 : vector<8x1xf32> to vector<8x16xf32>
    %60 = arith.mulf %58, %59 : vector<8x16xf32>
    %61 = vector.broadcast %39 : vector<8x1xf32> to vector<8x16xf32>
    %62 = arith.addf %60, %61 : vector<8x16xf32>
    %cst_47 = arith.constant 0.000000e+00 : f32
    %63 = vector.broadcast %cst_47 : f32 to vector<8x16xf32>
    %64 = arith.maximumf %62, %63 : vector<8x16xf32>
    %65 = vector.extract_strided_slice %64 {offsets = [0, 0], sizes = [1, 16], strides = [1, 1]} : vector<8x16xf32> to vector<1x16xf32>
    %66 = vector.extract_strided_slice %64 {offsets = [0, 0], sizes = [1, 16], strides = [1, 1]} : vector<8x16xf32> to vector<1x16xf32>
    %67 = vector.extract_strided_slice %64 {offsets = [1, 0], sizes = [1, 16], strides = [1, 1]} : vector<8x16xf32> to vector<1x16xf32>
    %68 = vector.extract_strided_slice %64 {offsets = [1, 0], sizes = [1, 16], strides = [1, 1]} : vector<8x16xf32> to vector<1x16xf32>
    %69 = vector.extract_strided_slice %64 {offsets = [2, 0], sizes = [1, 16], strides = [1, 1]} : vector<8x16xf32> to vector<1x16xf32>
    %70 = vector.extract_strided_slice %64 {offsets = [2, 0], sizes = [1, 16], strides = [1, 1]} : vector<8x16xf32> to vector<1x16xf32>
    %71 = vector.extract_strided_slice %64 {offsets = [3, 0], sizes = [1, 16], strides = [1, 1]} : vector<8x16xf32> to vector<1x16xf32>
    %72 = vector.extract_strided_slice %64 {offsets = [3, 0], sizes = [1, 16], strides = [1, 1]} : vector<8x16xf32> to vector<1x16xf32>
    %73 = vector.extract_strided_slice %64 {offsets = [4, 0], sizes = [1, 16], strides = [1, 1]} : vector<8x16xf32> to vector<1x16xf32>
    %74 = vector.extract_strided_slice %64 {offsets = [4, 0], sizes = [1, 16], strides = [1, 1]} : vector<8x16xf32> to vector<1x16xf32>
    %75 = vector.extract_strided_slice %64 {offsets = [5, 0], sizes = [1, 16], strides = [1, 1]} : vector<8x16xf32> to vector<1x16xf32>
    %76 = vector.extract_strided_slice %64 {offsets = [5, 0], sizes = [1, 16], strides = [1, 1]} : vector<8x16xf32> to vector<1x16xf32>
    %77 = vector.extract_strided_slice %64 {offsets = [6, 0], sizes = [1, 16], strides = [1, 1]} : vector<8x16xf32> to vector<1x16xf32>
    %78 = vector.extract_strided_slice %64 {offsets = [6, 0], sizes = [1, 16], strides = [1, 1]} : vector<8x16xf32> to vector<1x16xf32>
    %79 = vector.extract_strided_slice %64 {offsets = [7, 0], sizes = [1, 16], strides = [1, 1]} : vector<8x16xf32> to vector<1x16xf32>
    %80 = vector.extract_strided_slice %64 {offsets = [7, 0], sizes = [1, 16], strides = [1, 1]} : vector<8x16xf32> to vector<1x16xf32>
    %81 = tpu.concatenate %65, %66, %67, %68, %69, %70, %71, %72, %73, %74, %75, %76, %77, %78, %79, %80 in 0 : vector<1x16xf32>, vector<1x16xf32>, vector<1x16xf32>, vector<1x16xf32>, vector<1x16xf32>, vector<1x16xf32>, vector<1x16xf32>, vector<1x16xf32>, vector<1x16xf32>, vector<1x16xf32>, vector<1x16xf32>, vector<1x16xf32>, vector<1x16xf32>, vector<1x16xf32>, vector<1x16xf32>, vector<1x16xf32> -> vector<16x16xf32>
    %82 = vector.broadcast %40 : vector<16x1xf32> to vector<16x16xf32>
    %83 = arith.mulf %81, %82 : vector<16x16xf32>
    %84 = vector.broadcast %41 : vector<16x1xf32> to vector<16x16xf32>
    %85 = arith.mulf %81, %84 : vector<16x16xf32>
    %86 = vector.broadcast %42 : vector<16x1xf32> to vector<16x16xf32>
    %87 = arith.mulf %81, %86 : vector<16x16xf32>
    %88 = vector.extract_strided_slice %83 {offsets = [0, 0], sizes = [16, 4], strides = [1, 1]} : vector<16x16xf32> to vector<16x4xf32>
    %89 = vector.extract_strided_slice %85 {offsets = [0, 0], sizes = [16, 4], strides = [1, 1]} : vector<16x16xf32> to vector<16x4xf32>
    %90 = vector.extract_strided_slice %87 {offsets = [0, 0], sizes = [16, 4], strides = [1, 1]} : vector<16x16xf32> to vector<16x4xf32>
    %cst_48 = arith.constant dense<0.000000e+00> : vector<16x16xf32>
    %91 = tpu.matmul %88, %89, %cst_48 {dimension_numbers = #tpu.dot_dimension_numbers<[1], [1], [0], [0], [0, 0, 1, 0], [], []>} : vector<16x4xf32>, vector<16x4xf32>, vector<16x16xf32> -> vector<16x16xf32>
    %cst_49 = arith.constant 5.000000e-01 : f32
    %92 = vector.broadcast %cst_49 : f32 to vector<16x16xf32>
    %93 = arith.mulf %91, %92 : vector<16x16xf32>
    %cst_50 = arith.constant dense<0xFF800000> : vector<16xf32>
    %94 = vector.multi_reduction <maximumf>, %93, %cst_50 [1] : vector<16x16xf32> to vector<16xf32>
    %95 = vector.shape_cast %94 : vector<16xf32> to vector<16x1xf32>
    %96 = vector.broadcast %95 : vector<16x1xf32> to vector<16x16xf32>
    %97 = arith.subf %93, %96 : vector<16x16xf32>
    %98 = math.exp %97 : vector<16x16xf32>
    %cst_51 = arith.constant dense<0.000000e+00> : vector<16xf32>
    %99 = vector.multi_reduction <add>, %98, %cst_51 [1] : vector<16x16xf32> to vector<16xf32>
    %100 = vector.shape_cast %99 : vector<16xf32> to vector<16x1xf32>
    %101 = vector.broadcast %100 : vector<16x1xf32> to vector<16x16xf32>
    %102 = arith.divf %98, %101 : vector<16x16xf32>
    %cst_52 = arith.constant dense<0.000000e+00> : vector<16x4xf32>
    %103 = tpu.matmul %102, %90, %cst_52 {dimension_numbers = #tpu.dot_dimension_numbers<[1], [0], [0], [1], [0, 0, 1, 1], [], []>} : vector<16x16xf32>, vector<16x4xf32>, vector<16x4xf32> -> vector<16x4xf32>
    %104 = vector.extract_strided_slice %83 {offsets = [0, 4], sizes = [16, 4], strides = [1, 1]} : vector<16x16xf32> to vector<16x4xf32>
    %105 = vector.extract_strided_slice %85 {offsets = [0, 4], sizes = [16, 4], strides = [1, 1]} : vector<16x16xf32> to vector<16x4xf32>
    %106 = vector.extract_strided_slice %87 {offsets = [0, 4], sizes = [16, 4], strides = [1, 1]} : vector<16x16xf32> to vector<16x4xf32>
    %cst_53 = arith.constant dense<0.000000e+00> : vector<16x16xf32>
    %107 = tpu.matmul %104, %105, %cst_53 {dimension_numbers = #tpu.dot_dimension_numbers<[1], [1], [0], [0], [0, 0, 1, 0], [], []>} : vector<16x4xf32>, vector<16x4xf32>, vector<16x16xf32> -> vector<16x16xf32>
    %cst_54 = arith.constant 5.000000e-01 : f32
    %108 = vector.broadcast %cst_54 : f32 to vector<16x16xf32>
    %109 = arith.mulf %107, %108 : vector<16x16xf32>
    %cst_55 = arith.constant dense<0xFF800000> : vector<16xf32>
    %110 = vector.multi_reduction <maximumf>, %109, %cst_55 [1] : vector<16x16xf32> to vector<16xf32>
    %111 = vector.shape_cast %110 : vector<16xf32> to vector<16x1xf32>
    %112 = vector.broadcast %111 : vector<16x1xf32> to vector<16x16xf32>
    %113 = arith.subf %109, %112 : vector<16x16xf32>
    %114 = math.exp %113 : vector<16x16xf32>
    %cst_56 = arith.constant dense<0.000000e+00> : vector<16xf32>
    %115 = vector.multi_reduction <add>, %114, %cst_56 [1] : vector<16x16xf32> to vector<16xf32>
    %116 = vector.shape_cast %115 : vector<16xf32> to vector<16x1xf32>
    %117 = vector.broadcast %116 : vector<16x1xf32> to vector<16x16xf32>
    %118 = arith.divf %114, %117 : vector<16x16xf32>
    %cst_57 = arith.constant dense<0.000000e+00> : vector<16x4xf32>
    %119 = tpu.matmul %118, %106, %cst_57 {dimension_numbers = #tpu.dot_dimension_numbers<[1], [0], [0], [1], [0, 0, 1, 1], [], []>} : vector<16x16xf32>, vector<16x4xf32>, vector<16x4xf32> -> vector<16x4xf32>
    %120 = tpu.concatenate %103, %119 in 1 : vector<16x4xf32>, vector<16x4xf32> -> vector<16x8xf32>
    %121 = vector.extract_strided_slice %83 {offsets = [0, 8], sizes = [16, 8], strides = [1, 1]} : vector<16x16xf32> to vector<16x8xf32>
    %122 = vector.extract_strided_slice %85 {offsets = [0, 8], sizes = [16, 8], strides = [1, 1]} : vector<16x16xf32> to vector<16x8xf32>
    %123 = vector.extract_strided_slice %87 {offsets = [0, 8], sizes = [16, 8], strides = [1, 1]} : vector<16x16xf32> to vector<16x8xf32>
    %124 = vector.extract_strided_slice %121 {offsets = [0, 0], sizes = [16, 7], strides = [1, 1]} : vector<16x8xf32> to vector<16x7xf32>
    %125 = tpu.concatenate %56, %124 in 1 : vector<16x1xf32>, vector<16x7xf32> -> vector<16x8xf32>
    %126 = vector.extract_strided_slice %121 {offsets = [0, 1], sizes = [16, 7], strides = [1, 1]} : vector<16x8xf32> to vector<16x7xf32>
    %127 = tpu.concatenate %126, %56 in 1 : vector<16x7xf32>, vector<16x1xf32> -> vector<16x8xf32>
    %128 = vector.extract_strided_slice %122 {offsets = [0, 0], sizes = [15, 8], strides = [1, 1]} : vector<16x8xf32> to vector<15x8xf32>
    %129 = tpu.concatenate %55, %128 in 0 : vector<1x8xf32>, vector<15x8xf32> -> vector<16x8xf32>
    %130 = vector.extract_strided_slice %122 {offsets = [1, 0], sizes = [15, 8], strides = [1, 1]} : vector<16x8xf32> to vector<15x8xf32>
    %131 = tpu.concatenate %130, %55 in 0 : vector<15x8xf32>, vector<1x8xf32> -> vector<16x8xf32>
    %132 = arith.mulf %44, %125 : vector<16x8xf32>
    %133 = arith.mulf %46, %121 : vector<16x8xf32>
    %134 = arith.addf %132, %133 : vector<16x8xf32>
    %135 = arith.mulf %48, %127 : vector<16x8xf32>
    %136 = arith.addf %134, %135 : vector<16x8xf32>
    %137 = arith.mulf %50, %129 : vector<16x8xf32>
    %138 = arith.mulf %52, %122 : vector<16x8xf32>
    %139 = arith.addf %137, %138 : vector<16x8xf32>
    %140 = arith.mulf %54, %131 : vector<16x8xf32>
    %141 = arith.addf %139, %140 : vector<16x8xf32>
    %142 = arith.addf %136, %141 : vector<16x8xf32>
    %143 = arith.addf %142, %123 : vector<16x8xf32>
    %144 = vector.extract_strided_slice %143 {offsets = [0, 0], sizes = [1, 8], strides = [1, 1]} : vector<16x8xf32> to vector<1x8xf32>
    %145 = vector.extract_strided_slice %143 {offsets = [2, 0], sizes = [1, 8], strides = [1, 1]} : vector<16x8xf32> to vector<1x8xf32>
    %146 = vector.extract_strided_slice %143 {offsets = [4, 0], sizes = [1, 8], strides = [1, 1]} : vector<16x8xf32> to vector<1x8xf32>
    %147 = vector.extract_strided_slice %143 {offsets = [6, 0], sizes = [1, 8], strides = [1, 1]} : vector<16x8xf32> to vector<1x8xf32>
    %148 = vector.extract_strided_slice %143 {offsets = [8, 0], sizes = [1, 8], strides = [1, 1]} : vector<16x8xf32> to vector<1x8xf32>
    %149 = vector.extract_strided_slice %143 {offsets = [10, 0], sizes = [1, 8], strides = [1, 1]} : vector<16x8xf32> to vector<1x8xf32>
    %150 = vector.extract_strided_slice %143 {offsets = [12, 0], sizes = [1, 8], strides = [1, 1]} : vector<16x8xf32> to vector<1x8xf32>
    %151 = vector.extract_strided_slice %143 {offsets = [14, 0], sizes = [1, 8], strides = [1, 1]} : vector<16x8xf32> to vector<1x8xf32>
    %152 = tpu.concatenate %144, %145, %146, %147, %148, %149, %150, %151 in 0 : vector<1x8xf32>, vector<1x8xf32>, vector<1x8xf32>, vector<1x8xf32>, vector<1x8xf32>, vector<1x8xf32>, vector<1x8xf32>, vector<1x8xf32> -> vector<8x8xf32>
    %153 = vector.extract_strided_slice %143 {offsets = [1, 0], sizes = [1, 8], strides = [1, 1]} : vector<16x8xf32> to vector<1x8xf32>
    %154 = vector.extract_strided_slice %143 {offsets = [3, 0], sizes = [1, 8], strides = [1, 1]} : vector<16x8xf32> to vector<1x8xf32>
    %155 = vector.extract_strided_slice %143 {offsets = [5, 0], sizes = [1, 8], strides = [1, 1]} : vector<16x8xf32> to vector<1x8xf32>
    %156 = vector.extract_strided_slice %143 {offsets = [7, 0], sizes = [1, 8], strides = [1, 1]} : vector<16x8xf32> to vector<1x8xf32>
    %157 = vector.extract_strided_slice %143 {offsets = [9, 0], sizes = [1, 8], strides = [1, 1]} : vector<16x8xf32> to vector<1x8xf32>
    %158 = vector.extract_strided_slice %143 {offsets = [11, 0], sizes = [1, 8], strides = [1, 1]} : vector<16x8xf32> to vector<1x8xf32>
    %159 = vector.extract_strided_slice %143 {offsets = [13, 0], sizes = [1, 8], strides = [1, 1]} : vector<16x8xf32> to vector<1x8xf32>
    %160 = vector.extract_strided_slice %143 {offsets = [15, 0], sizes = [1, 8], strides = [1, 1]} : vector<16x8xf32> to vector<1x8xf32>
    %161 = tpu.concatenate %153, %154, %155, %156, %157, %158, %159, %160 in 0 : vector<1x8xf32>, vector<1x8xf32>, vector<1x8xf32>, vector<1x8xf32>, vector<1x8xf32>, vector<1x8xf32>, vector<1x8xf32>, vector<1x8xf32> -> vector<8x8xf32>
    %162 = vector.extract_strided_slice %152 {offsets = [0, 0], sizes = [8, 4], strides = [1, 1]} : vector<8x8xf32> to vector<8x4xf32>
    %163 = vector.extract_strided_slice %161 {offsets = [0, 0], sizes = [8, 4], strides = [1, 1]} : vector<8x8xf32> to vector<8x4xf32>
    %164 = tpu.concatenate %162, %163 in 1 : vector<8x4xf32>, vector<8x4xf32> -> vector<8x8xf32>
    %165 = vector.extract_strided_slice %152 {offsets = [0, 4], sizes = [8, 4], strides = [1, 1]} : vector<8x8xf32> to vector<8x4xf32>
    %166 = vector.extract_strided_slice %161 {offsets = [0, 4], sizes = [8, 4], strides = [1, 1]} : vector<8x8xf32> to vector<8x4xf32>
    %167 = tpu.concatenate %165, %166 in 1 : vector<8x4xf32>, vector<8x4xf32> -> vector<8x8xf32>
    %168 = tpu.concatenate %164, %167 in 0 : vector<8x8xf32>, vector<8x8xf32> -> vector<16x8xf32>
    %169 = tpu.concatenate %120, %168 in 1 : vector<16x8xf32>, vector<16x8xf32> -> vector<16x16xf32>
    %170 = vector.extract_strided_slice %169 {offsets = [0, 0], sizes = [16, 1], strides = [1, 1]} : vector<16x16xf32> to vector<16x1xf32>
    %171 = vector.extract_strided_slice %169 {offsets = [0, 1], sizes = [16, 1], strides = [1, 1]} : vector<16x16xf32> to vector<16x1xf32>
    %172 = arith.addf %170, %171 : vector<16x1xf32>
    %cst_58 = arith.constant 5.000000e-01 : f32
    %173 = vector.broadcast %cst_58 : f32 to vector<16x1xf32>
    %174 = arith.mulf %173, %172 : vector<16x1xf32>
    %175 = vector.extract_strided_slice %169 {offsets = [0, 2], sizes = [16, 1], strides = [1, 1]} : vector<16x16xf32> to vector<16x1xf32>
    %176 = vector.extract_strided_slice %169 {offsets = [0, 3], sizes = [16, 1], strides = [1, 1]} : vector<16x16xf32> to vector<16x1xf32>
    %177 = arith.addf %175, %176 : vector<16x1xf32>
    %cst_59 = arith.constant 5.000000e-01 : f32
    %178 = vector.broadcast %cst_59 : f32 to vector<16x1xf32>
    %179 = arith.mulf %178, %177 : vector<16x1xf32>
    %180 = vector.extract_strided_slice %169 {offsets = [0, 4], sizes = [16, 1], strides = [1, 1]} : vector<16x16xf32> to vector<16x1xf32>
    %181 = vector.extract_strided_slice %169 {offsets = [0, 5], sizes = [16, 1], strides = [1, 1]} : vector<16x16xf32> to vector<16x1xf32>
    %182 = arith.addf %180, %181 : vector<16x1xf32>
    %cst_60 = arith.constant 5.000000e-01 : f32
    %183 = vector.broadcast %cst_60 : f32 to vector<16x1xf32>
    %184 = arith.mulf %183, %182 : vector<16x1xf32>
    %185 = vector.extract_strided_slice %169 {offsets = [0, 6], sizes = [16, 1], strides = [1, 1]} : vector<16x16xf32> to vector<16x1xf32>
    %186 = vector.extract_strided_slice %169 {offsets = [0, 7], sizes = [16, 1], strides = [1, 1]} : vector<16x16xf32> to vector<16x1xf32>
    %187 = arith.addf %185, %186 : vector<16x1xf32>
    %cst_61 = arith.constant 5.000000e-01 : f32
    %188 = vector.broadcast %cst_61 : f32 to vector<16x1xf32>
    %189 = arith.mulf %188, %187 : vector<16x1xf32>
    %190 = vector.extract_strided_slice %169 {offsets = [0, 8], sizes = [16, 1], strides = [1, 1]} : vector<16x16xf32> to vector<16x1xf32>
    %191 = vector.extract_strided_slice %169 {offsets = [0, 9], sizes = [16, 1], strides = [1, 1]} : vector<16x16xf32> to vector<16x1xf32>
    %192 = arith.addf %190, %191 : vector<16x1xf32>
    %cst_62 = arith.constant 5.000000e-01 : f32
    %193 = vector.broadcast %cst_62 : f32 to vector<16x1xf32>
    %194 = arith.mulf %193, %192 : vector<16x1xf32>
    %195 = vector.extract_strided_slice %169 {offsets = [0, 10], sizes = [16, 1], strides = [1, 1]} : vector<16x16xf32> to vector<16x1xf32>
    %196 = vector.extract_strided_slice %169 {offsets = [0, 11], sizes = [16, 1], strides = [1, 1]} : vector<16x16xf32> to vector<16x1xf32>
    %197 = arith.addf %195, %196 : vector<16x1xf32>
    %cst_63 = arith.constant 5.000000e-01 : f32
    %198 = vector.broadcast %cst_63 : f32 to vector<16x1xf32>
    %199 = arith.mulf %198, %197 : vector<16x1xf32>
    %200 = vector.extract_strided_slice %169 {offsets = [0, 12], sizes = [16, 1], strides = [1, 1]} : vector<16x16xf32> to vector<16x1xf32>
    %201 = vector.extract_strided_slice %169 {offsets = [0, 13], sizes = [16, 1], strides = [1, 1]} : vector<16x16xf32> to vector<16x1xf32>
    %202 = arith.addf %200, %201 : vector<16x1xf32>
    %cst_64 = arith.constant 5.000000e-01 : f32
    %203 = vector.broadcast %cst_64 : f32 to vector<16x1xf32>
    %204 = arith.mulf %203, %202 : vector<16x1xf32>
    %205 = vector.extract_strided_slice %169 {offsets = [0, 14], sizes = [16, 1], strides = [1, 1]} : vector<16x16xf32> to vector<16x1xf32>
    %206 = vector.extract_strided_slice %169 {offsets = [0, 15], sizes = [16, 1], strides = [1, 1]} : vector<16x16xf32> to vector<16x1xf32>
    %207 = arith.addf %205, %206 : vector<16x1xf32>
    %cst_65 = arith.constant 5.000000e-01 : f32
    %208 = vector.broadcast %cst_65 : f32 to vector<16x1xf32>
    %209 = arith.mulf %208, %207 : vector<16x1xf32>
    %210 = tpu.concatenate %174, %179, %184, %189, %194, %199, %204, %209 in 1 : vector<16x1xf32>, vector<16x1xf32>, vector<16x1xf32>, vector<16x1xf32>, vector<16x1xf32>, vector<16x1xf32>, vector<16x1xf32>, vector<16x1xf32> -> vector<16x8xf32>
    %c0_66 = arith.constant 0 : index
    %c0_67 = arith.constant 0 : index
    %c0_68 = arith.constant 0 : index
    %211 = vector.load %arg5[%c0_66, %c0_67, %c0_68] : memref<2x16x8xf32, #tpu.memory_space<vmem>>, vector<1x16x8xf32>
    %212 = vector.shape_cast %211 : vector<1x16x8xf32> to vector<16x8xf32>
    %213 = vector.shape_cast %210 : vector<16x8xf32> to vector<1x16x8xf32>
    tpu.vector_store %arg5[%c0_66, %c0_67, %c0_68], %213 {strides = array<i32>} : memref<2x16x8xf32, #tpu.memory_space<vmem>>, vector<1x16x8xf32>,
    %c1_69 = arith.constant 1 : index
    %c0_70 = arith.constant 0 : index
    %c0_71 = arith.constant 0 : index
    %214 = vector.load %arg1[%c1_69, %c0_70, %c0_71] : memref<2x8x16xf32, #tpu.memory_space<vmem>>, vector<1x8x16xf32>
    %215 = vector.shape_cast %214 : vector<1x8x16xf32> to vector<8x16xf32>
    %216 = vector.broadcast %37 : vector<8x1xf32> to vector<8x16xf32>
    %217 = arith.mulf %215, %216 : vector<8x16xf32>
    %218 = vector.broadcast %39 : vector<8x1xf32> to vector<8x16xf32>
    %219 = arith.addf %217, %218 : vector<8x16xf32>
    %cst_72 = arith.constant 0.000000e+00 : f32
    %220 = vector.broadcast %cst_72 : f32 to vector<8x16xf32>
    %221 = arith.maximumf %219, %220 : vector<8x16xf32>
    %222 = vector.extract_strided_slice %221 {offsets = [0, 0], sizes = [1, 16], strides = [1, 1]} : vector<8x16xf32> to vector<1x16xf32>
    %223 = vector.extract_strided_slice %221 {offsets = [0, 0], sizes = [1, 16], strides = [1, 1]} : vector<8x16xf32> to vector<1x16xf32>
    %224 = vector.extract_strided_slice %221 {offsets = [1, 0], sizes = [1, 16], strides = [1, 1]} : vector<8x16xf32> to vector<1x16xf32>
    %225 = vector.extract_strided_slice %221 {offsets = [1, 0], sizes = [1, 16], strides = [1, 1]} : vector<8x16xf32> to vector<1x16xf32>
    %226 = vector.extract_strided_slice %221 {offsets = [2, 0], sizes = [1, 16], strides = [1, 1]} : vector<8x16xf32> to vector<1x16xf32>
    %227 = vector.extract_strided_slice %221 {offsets = [2, 0], sizes = [1, 16], strides = [1, 1]} : vector<8x16xf32> to vector<1x16xf32>
    %228 = vector.extract_strided_slice %221 {offsets = [3, 0], sizes = [1, 16], strides = [1, 1]} : vector<8x16xf32> to vector<1x16xf32>
    %229 = vector.extract_strided_slice %221 {offsets = [3, 0], sizes = [1, 16], strides = [1, 1]} : vector<8x16xf32> to vector<1x16xf32>
    %230 = vector.extract_strided_slice %221 {offsets = [4, 0], sizes = [1, 16], strides = [1, 1]} : vector<8x16xf32> to vector<1x16xf32>
    %231 = vector.extract_strided_slice %221 {offsets = [4, 0], sizes = [1, 16], strides = [1, 1]} : vector<8x16xf32> to vector<1x16xf32>
    %232 = vector.extract_strided_slice %221 {offsets = [5, 0], sizes = [1, 16], strides = [1, 1]} : vector<8x16xf32> to vector<1x16xf32>
    %233 = vector.extract_strided_slice %221 {offsets = [5, 0], sizes = [1, 16], strides = [1, 1]} : vector<8x16xf32> to vector<1x16xf32>
    %234 = vector.extract_strided_slice %221 {offsets = [6, 0], sizes = [1, 16], strides = [1, 1]} : vector<8x16xf32> to vector<1x16xf32>
    %235 = vector.extract_strided_slice %221 {offsets = [6, 0], sizes = [1, 16], strides = [1, 1]} : vector<8x16xf32> to vector<1x16xf32>
    %236 = vector.extract_strided_slice %221 {offsets = [7, 0], sizes = [1, 16], strides = [1, 1]} : vector<8x16xf32> to vector<1x16xf32>
    %237 = vector.extract_strided_slice %221 {offsets = [7, 0], sizes = [1, 16], strides = [1, 1]} : vector<8x16xf32> to vector<1x16xf32>
    %238 = tpu.concatenate %222, %223, %224, %225, %226, %227, %228, %229, %230, %231, %232, %233, %234, %235, %236, %237 in 0 : vector<1x16xf32>, vector<1x16xf32>, vector<1x16xf32>, vector<1x16xf32>, vector<1x16xf32>, vector<1x16xf32>, vector<1x16xf32>, vector<1x16xf32>, vector<1x16xf32>, vector<1x16xf32>, vector<1x16xf32>, vector<1x16xf32>, vector<1x16xf32>, vector<1x16xf32>, vector<1x16xf32>, vector<1x16xf32> -> vector<16x16xf32>
    %239 = vector.broadcast %40 : vector<16x1xf32> to vector<16x16xf32>
    %240 = arith.mulf %238, %239 : vector<16x16xf32>
    %241 = vector.broadcast %41 : vector<16x1xf32> to vector<16x16xf32>
    %242 = arith.mulf %238, %241 : vector<16x16xf32>
    %243 = vector.broadcast %42 : vector<16x1xf32> to vector<16x16xf32>
    %244 = arith.mulf %238, %243 : vector<16x16xf32>
    %245 = vector.extract_strided_slice %240 {offsets = [0, 0], sizes = [16, 4], strides = [1, 1]} : vector<16x16xf32> to vector<16x4xf32>
    %246 = vector.extract_strided_slice %242 {offsets = [0, 0], sizes = [16, 4], strides = [1, 1]} : vector<16x16xf32> to vector<16x4xf32>
    %247 = vector.extract_strided_slice %244 {offsets = [0, 0], sizes = [16, 4], strides = [1, 1]} : vector<16x16xf32> to vector<16x4xf32>
    %cst_73 = arith.constant dense<0.000000e+00> : vector<16x16xf32>
    %248 = tpu.matmul %245, %246, %cst_73 {dimension_numbers = #tpu.dot_dimension_numbers<[1], [1], [0], [0], [0, 0, 1, 0], [], []>} : vector<16x4xf32>, vector<16x4xf32>, vector<16x16xf32> -> vector<16x16xf32>
    %cst_74 = arith.constant 5.000000e-01 : f32
    %249 = vector.broadcast %cst_74 : f32 to vector<16x16xf32>
    %250 = arith.mulf %248, %249 : vector<16x16xf32>
    %cst_75 = arith.constant dense<0xFF800000> : vector<16xf32>
    %251 = vector.multi_reduction <maximumf>, %250, %cst_75 [1] : vector<16x16xf32> to vector<16xf32>
    %252 = vector.shape_cast %251 : vector<16xf32> to vector<16x1xf32>
    %253 = vector.broadcast %252 : vector<16x1xf32> to vector<16x16xf32>
    %254 = arith.subf %250, %253 : vector<16x16xf32>
    %255 = math.exp %254 : vector<16x16xf32>
    %cst_76 = arith.constant dense<0.000000e+00> : vector<16xf32>
    %256 = vector.multi_reduction <add>, %255, %cst_76 [1] : vector<16x16xf32> to vector<16xf32>
    %257 = vector.shape_cast %256 : vector<16xf32> to vector<16x1xf32>
    %258 = vector.broadcast %257 : vector<16x1xf32> to vector<16x16xf32>
    %259 = arith.divf %255, %258 : vector<16x16xf32>
    %cst_77 = arith.constant dense<0.000000e+00> : vector<16x4xf32>
    %260 = tpu.matmul %259, %247, %cst_77 {dimension_numbers = #tpu.dot_dimension_numbers<[1], [0], [0], [1], [0, 0, 1, 1], [], []>} : vector<16x16xf32>, vector<16x4xf32>, vector<16x4xf32> -> vector<16x4xf32>
    %261 = vector.extract_strided_slice %240 {offsets = [0, 4], sizes = [16, 4], strides = [1, 1]} : vector<16x16xf32> to vector<16x4xf32>
    %262 = vector.extract_strided_slice %242 {offsets = [0, 4], sizes = [16, 4], strides = [1, 1]} : vector<16x16xf32> to vector<16x4xf32>
    %263 = vector.extract_strided_slice %244 {offsets = [0, 4], sizes = [16, 4], strides = [1, 1]} : vector<16x16xf32> to vector<16x4xf32>
    %cst_78 = arith.constant dense<0.000000e+00> : vector<16x16xf32>
    %264 = tpu.matmul %261, %262, %cst_78 {dimension_numbers = #tpu.dot_dimension_numbers<[1], [1], [0], [0], [0, 0, 1, 0], [], []>} : vector<16x4xf32>, vector<16x4xf32>, vector<16x16xf32> -> vector<16x16xf32>
    %cst_79 = arith.constant 5.000000e-01 : f32
    %265 = vector.broadcast %cst_79 : f32 to vector<16x16xf32>
    %266 = arith.mulf %264, %265 : vector<16x16xf32>
    %cst_80 = arith.constant dense<0xFF800000> : vector<16xf32>
    %267 = vector.multi_reduction <maximumf>, %266, %cst_80 [1] : vector<16x16xf32> to vector<16xf32>
    %268 = vector.shape_cast %267 : vector<16xf32> to vector<16x1xf32>
    %269 = vector.broadcast %268 : vector<16x1xf32> to vector<16x16xf32>
    %270 = arith.subf %266, %269 : vector<16x16xf32>
    %271 = math.exp %270 : vector<16x16xf32>
    %cst_81 = arith.constant dense<0.000000e+00> : vector<16xf32>
    %272 = vector.multi_reduction <add>, %271, %cst_81 [1] : vector<16x16xf32> to vector<16xf32>
    %273 = vector.shape_cast %272 : vector<16xf32> to vector<16x1xf32>
    %274 = vector.broadcast %273 : vector<16x1xf32> to vector<16x16xf32>
    %275 = arith.divf %271, %274 : vector<16x16xf32>
    %cst_82 = arith.constant dense<0.000000e+00> : vector<16x4xf32>
    %276 = tpu.matmul %275, %263, %cst_82 {dimension_numbers = #tpu.dot_dimension_numbers<[1], [0], [0], [1], [0, 0, 1, 1], [], []>} : vector<16x16xf32>, vector<16x4xf32>, vector<16x4xf32> -> vector<16x4xf32>
    %277 = tpu.concatenate %260, %276 in 1 : vector<16x4xf32>, vector<16x4xf32> -> vector<16x8xf32>
    %278 = vector.extract_strided_slice %240 {offsets = [0, 8], sizes = [16, 8], strides = [1, 1]} : vector<16x16xf32> to vector<16x8xf32>
    %279 = vector.extract_strided_slice %242 {offsets = [0, 8], sizes = [16, 8], strides = [1, 1]} : vector<16x16xf32> to vector<16x8xf32>
    %280 = vector.extract_strided_slice %244 {offsets = [0, 8], sizes = [16, 8], strides = [1, 1]} : vector<16x16xf32> to vector<16x8xf32>
    %281 = vector.extract_strided_slice %278 {offsets = [0, 0], sizes = [16, 7], strides = [1, 1]} : vector<16x8xf32> to vector<16x7xf32>
    %282 = tpu.concatenate %56, %281 in 1 : vector<16x1xf32>, vector<16x7xf32> -> vector<16x8xf32>
    %283 = vector.extract_strided_slice %278 {offsets = [0, 1], sizes = [16, 7], strides = [1, 1]} : vector<16x8xf32> to vector<16x7xf32>
    %284 = tpu.concatenate %283, %56 in 1 : vector<16x7xf32>, vector<16x1xf32> -> vector<16x8xf32>
    %285 = vector.extract_strided_slice %279 {offsets = [0, 0], sizes = [15, 8], strides = [1, 1]} : vector<16x8xf32> to vector<15x8xf32>
    %286 = tpu.concatenate %55, %285 in 0 : vector<1x8xf32>, vector<15x8xf32> -> vector<16x8xf32>
    %287 = vector.extract_strided_slice %279 {offsets = [1, 0], sizes = [15, 8], strides = [1, 1]} : vector<16x8xf32> to vector<15x8xf32>
    %288 = tpu.concatenate %287, %55 in 0 : vector<15x8xf32>, vector<1x8xf32> -> vector<16x8xf32>
    %289 = arith.mulf %44, %282 : vector<16x8xf32>
    %290 = arith.mulf %46, %278 : vector<16x8xf32>
    %291 = arith.addf %289, %290 : vector<16x8xf32>
    %292 = arith.mulf %48, %284 : vector<16x8xf32>
    %293 = arith.addf %291, %292 : vector<16x8xf32>
    %294 = arith.mulf %50, %286 : vector<16x8xf32>
    %295 = arith.mulf %52, %279 : vector<16x8xf32>
    %296 = arith.addf %294, %295 : vector<16x8xf32>
    %297 = arith.mulf %54, %288 : vector<16x8xf32>
    %298 = arith.addf %296, %297 : vector<16x8xf32>
    %299 = arith.addf %293, %298 : vector<16x8xf32>
    %300 = arith.addf %299, %280 : vector<16x8xf32>
    %301 = vector.extract_strided_slice %300 {offsets = [0, 0], sizes = [1, 8], strides = [1, 1]} : vector<16x8xf32> to vector<1x8xf32>
    %302 = vector.extract_strided_slice %300 {offsets = [2, 0], sizes = [1, 8], strides = [1, 1]} : vector<16x8xf32> to vector<1x8xf32>
    %303 = vector.extract_strided_slice %300 {offsets = [4, 0], sizes = [1, 8], strides = [1, 1]} : vector<16x8xf32> to vector<1x8xf32>
    %304 = vector.extract_strided_slice %300 {offsets = [6, 0], sizes = [1, 8], strides = [1, 1]} : vector<16x8xf32> to vector<1x8xf32>
    %305 = vector.extract_strided_slice %300 {offsets = [8, 0], sizes = [1, 8], strides = [1, 1]} : vector<16x8xf32> to vector<1x8xf32>
    %306 = vector.extract_strided_slice %300 {offsets = [10, 0], sizes = [1, 8], strides = [1, 1]} : vector<16x8xf32> to vector<1x8xf32>
    %307 = vector.extract_strided_slice %300 {offsets = [12, 0], sizes = [1, 8], strides = [1, 1]} : vector<16x8xf32> to vector<1x8xf32>
    %308 = vector.extract_strided_slice %300 {offsets = [14, 0], sizes = [1, 8], strides = [1, 1]} : vector<16x8xf32> to vector<1x8xf32>
    %309 = tpu.concatenate %301, %302, %303, %304, %305, %306, %307, %308 in 0 : vector<1x8xf32>, vector<1x8xf32>, vector<1x8xf32>, vector<1x8xf32>, vector<1x8xf32>, vector<1x8xf32>, vector<1x8xf32>, vector<1x8xf32> -> vector<8x8xf32>
    %310 = vector.extract_strided_slice %300 {offsets = [1, 0], sizes = [1, 8], strides = [1, 1]} : vector<16x8xf32> to vector<1x8xf32>
    %311 = vector.extract_strided_slice %300 {offsets = [3, 0], sizes = [1, 8], strides = [1, 1]} : vector<16x8xf32> to vector<1x8xf32>
    %312 = vector.extract_strided_slice %300 {offsets = [5, 0], sizes = [1, 8], strides = [1, 1]} : vector<16x8xf32> to vector<1x8xf32>
    %313 = vector.extract_strided_slice %300 {offsets = [7, 0], sizes = [1, 8], strides = [1, 1]} : vector<16x8xf32> to vector<1x8xf32>
    %314 = vector.extract_strided_slice %300 {offsets = [9, 0], sizes = [1, 8], strides = [1, 1]} : vector<16x8xf32> to vector<1x8xf32>
    %315 = vector.extract_strided_slice %300 {offsets = [11, 0], sizes = [1, 8], strides = [1, 1]} : vector<16x8xf32> to vector<1x8xf32>
    %316 = vector.extract_strided_slice %300 {offsets = [13, 0], sizes = [1, 8], strides = [1, 1]} : vector<16x8xf32> to vector<1x8xf32>
    %317 = vector.extract_strided_slice %300 {offsets = [15, 0], sizes = [1, 8], strides = [1, 1]} : vector<16x8xf32> to vector<1x8xf32>
    %318 = tpu.concatenate %310, %311, %312, %313, %314, %315, %316, %317 in 0 : vector<1x8xf32>, vector<1x8xf32>, vector<1x8xf32>, vector<1x8xf32>, vector<1x8xf32>, vector<1x8xf32>, vector<1x8xf32>, vector<1x8xf32> -> vector<8x8xf32>
    %319 = vector.extract_strided_slice %309 {offsets = [0, 0], sizes = [8, 4], strides = [1, 1]} : vector<8x8xf32> to vector<8x4xf32>
    %320 = vector.extract_strided_slice %318 {offsets = [0, 0], sizes = [8, 4], strides = [1, 1]} : vector<8x8xf32> to vector<8x4xf32>
    %321 = tpu.concatenate %319, %320 in 1 : vector<8x4xf32>, vector<8x4xf32> -> vector<8x8xf32>
    %322 = vector.extract_strided_slice %309 {offsets = [0, 4], sizes = [8, 4], strides = [1, 1]} : vector<8x8xf32> to vector<8x4xf32>
    %323 = vector.extract_strided_slice %318 {offsets = [0, 4], sizes = [8, 4], strides = [1, 1]} : vector<8x8xf32> to vector<8x4xf32>
    %324 = tpu.concatenate %322, %323 in 1 : vector<8x4xf32>, vector<8x4xf32> -> vector<8x8xf32>
    %325 = tpu.concatenate %321, %324 in 0 : vector<8x8xf32>, vector<8x8xf32> -> vector<16x8xf32>
    %326 = tpu.concatenate %277, %325 in 1 : vector<16x8xf32>, vector<16x8xf32> -> vector<16x16xf32>
    %327 = vector.extract_strided_slice %326 {offsets = [0, 0], sizes = [16, 1], strides = [1, 1]} : vector<16x16xf32> to vector<16x1xf32>
    %328 = vector.extract_strided_slice %326 {offsets = [0, 1], sizes = [16, 1], strides = [1, 1]} : vector<16x16xf32> to vector<16x1xf32>
    %329 = arith.addf %327, %328 : vector<16x1xf32>
    %cst_83 = arith.constant 5.000000e-01 : f32
    %330 = vector.broadcast %cst_83 : f32 to vector<16x1xf32>
    %331 = arith.mulf %330, %329 : vector<16x1xf32>
    %332 = vector.extract_strided_slice %326 {offsets = [0, 2], sizes = [16, 1], strides = [1, 1]} : vector<16x16xf32> to vector<16x1xf32>
    %333 = vector.extract_strided_slice %326 {offsets = [0, 3], sizes = [16, 1], strides = [1, 1]} : vector<16x16xf32> to vector<16x1xf32>
    %334 = arith.addf %332, %333 : vector<16x1xf32>
    %cst_84 = arith.constant 5.000000e-01 : f32
    %335 = vector.broadcast %cst_84 : f32 to vector<16x1xf32>
    %336 = arith.mulf %335, %334 : vector<16x1xf32>
    %337 = vector.extract_strided_slice %326 {offsets = [0, 4], sizes = [16, 1], strides = [1, 1]} : vector<16x16xf32> to vector<16x1xf32>
    %338 = vector.extract_strided_slice %326 {offsets = [0, 5], sizes = [16, 1], strides = [1, 1]} : vector<16x16xf32> to vector<16x1xf32>
    %339 = arith.addf %337, %338 : vector<16x1xf32>
    %cst_85 = arith.constant 5.000000e-01 : f32
    %340 = vector.broadcast %cst_85 : f32 to vector<16x1xf32>
    %341 = arith.mulf %340, %339 : vector<16x1xf32>
    %342 = vector.extract_strided_slice %326 {offsets = [0, 6], sizes = [16, 1], strides = [1, 1]} : vector<16x16xf32> to vector<16x1xf32>
    %343 = vector.extract_strided_slice %326 {offsets = [0, 7], sizes = [16, 1], strides = [1, 1]} : vector<16x16xf32> to vector<16x1xf32>
    %344 = arith.addf %342, %343 : vector<16x1xf32>
    %cst_86 = arith.constant 5.000000e-01 : f32
    %345 = vector.broadcast %cst_86 : f32 to vector<16x1xf32>
    %346 = arith.mulf %345, %344 : vector<16x1xf32>
    %347 = vector.extract_strided_slice %326 {offsets = [0, 8], sizes = [16, 1], strides = [1, 1]} : vector<16x16xf32> to vector<16x1xf32>
    %348 = vector.extract_strided_slice %326 {offsets = [0, 9], sizes = [16, 1], strides = [1, 1]} : vector<16x16xf32> to vector<16x1xf32>
    %349 = arith.addf %347, %348 : vector<16x1xf32>
    %cst_87 = arith.constant 5.000000e-01 : f32
    %350 = vector.broadcast %cst_87 : f32 to vector<16x1xf32>
    %351 = arith.mulf %350, %349 : vector<16x1xf32>
    %352 = vector.extract_strided_slice %326 {offsets = [0, 10], sizes = [16, 1], strides = [1, 1]} : vector<16x16xf32> to vector<16x1xf32>
    %353 = vector.extract_strided_slice %326 {offsets = [0, 11], sizes = [16, 1], strides = [1, 1]} : vector<16x16xf32> to vector<16x1xf32>
    %354 = arith.addf %352, %353 : vector<16x1xf32>
    %cst_88 = arith.constant 5.000000e-01 : f32
    %355 = vector.broadcast %cst_88 : f32 to vector<16x1xf32>
    %356 = arith.mulf %355, %354 : vector<16x1xf32>
    %357 = vector.extract_strided_slice %326 {offsets = [0, 12], sizes = [16, 1], strides = [1, 1]} : vector<16x16xf32> to vector<16x1xf32>
    %358 = vector.extract_strided_slice %326 {offsets = [0, 13], sizes = [16, 1], strides = [1, 1]} : vector<16x16xf32> to vector<16x1xf32>
    %359 = arith.addf %357, %358 : vector<16x1xf32>
    %cst_89 = arith.constant 5.000000e-01 : f32
    %360 = vector.broadcast %cst_89 : f32 to vector<16x1xf32>
    %361 = arith.mulf %360, %359 : vector<16x1xf32>
    %362 = vector.extract_strided_slice %326 {offsets = [0, 14], sizes = [16, 1], strides = [1, 1]} : vector<16x16xf32> to vector<16x1xf32>
    %363 = vector.extract_strided_slice %326 {offsets = [0, 15], sizes = [16, 1], strides = [1, 1]} : vector<16x16xf32> to vector<16x1xf32>
    %364 = arith.addf %362, %363 : vector<16x1xf32>
    %cst_90 = arith.constant 5.000000e-01 : f32
    %365 = vector.broadcast %cst_90 : f32 to vector<16x1xf32>
    %366 = arith.mulf %365, %364 : vector<16x1xf32>
    %367 = tpu.concatenate %331, %336, %341, %346, %351, %356, %361, %366 in 1 : vector<16x1xf32>, vector<16x1xf32>, vector<16x1xf32>, vector<16x1xf32>, vector<16x1xf32>, vector<16x1xf32>, vector<16x1xf32>, vector<16x1xf32> -> vector<16x8xf32>
    %c1_91 = arith.constant 1 : index
    %c0_92 = arith.constant 0 : index
    %c0_93 = arith.constant 0 : index
    %368 = vector.load %arg5[%c1_91, %c0_92, %c0_93] : memref<2x16x8xf32, #tpu.memory_space<vmem>>, vector<1x16x8xf32>
    %369 = vector.shape_cast %368 : vector<1x16x8xf32> to vector<16x8xf32>
    %370 = vector.shape_cast %367 : vector<16x8xf32> to vector<1x16x8xf32>
    tpu.vector_store %arg5[%c1_91, %c0_92, %c0_93], %370 {strides = array<i32>} : memref<2x16x8xf32, #tpu.memory_space<vmem>>, vector<1x16x8xf32>,
    return
  }
  func.func @transform_0(%arg0: i32) -> (i32, i32, i32) {
    %c0_i32 = arith.constant 0 : i32
    %c0_i32_0 = arith.constant 0 : i32
    %c0_i32_1 = arith.constant 0 : i32
    %c0_i32_2 = arith.constant 0 : i32
    return %c0_i32, %c0_i32_0, %c0_i32_1 : i32, i32, i32
  }
  func.func @transform_1(%arg0: i32) -> (i32, i32) {
    %c0_i32 = arith.constant 0 : i32
    %c0_i32_0 = arith.constant 0 : i32
    %c0_i32_1 = arith.constant 0 : i32
    return %c0_i32, %c0_i32_0 : i32, i32
  }
  func.func @transform_2(%arg0: i32) -> (i32, i32) {
    %c0_i32 = arith.constant 0 : i32
    %c0_i32_0 = arith.constant 0 : i32
    %c0_i32_1 = arith.constant 0 : i32
    return %c0_i32, %c0_i32_0 : i32, i32
  }
  func.func @transform_3(%arg0: i32) -> (i32, i32, i32) {
    %c0_i32 = arith.constant 0 : i32
    %c0_i32_0 = arith.constant 0 : i32
    %c0_i32_1 = arith.constant 0 : i32
    %c0_i32_2 = arith.constant 0 : i32
    return %c0_i32, %c0_i32_0, %c0_i32_1 : i32, i32, i32
  }
  func.func @transform_4(%arg0: i32) -> (i32, i32, i32) {
    %c0_i32 = arith.constant 0 : i32
    %c0_i32_0 = arith.constant 0 : i32
    %c0_i32_1 = arith.constant 0 : i32
    %c0_i32_2 = arith.constant 0 : i32
    return %c0_i32, %c0_i32_0, %c0_i32_1 : i32, i32, i32
  }
}

</mosaic_0001>

<llo_original>
// kernel: tpu_custom_call.1
$region0: #{tpu_custom_call.1}
  #allocation0 [shape = 'u32[]', space=smem, size = 0x4, offset = 0x4, fixed_abs, tag = 'smem constant byte address 0x4 - core index']
  #allocation1 [shape = 'u32[144,128]{1,0:T(1,128)}', space=vmem, size = 0x12000, scoped, tag = 'internal scratch']
  %s0 = inlined_call_operand.vmem [shape: f32[2,8,16], index: 0, kind: input, shape index: {}]
  %s1 = inlined_call_operand.vmem [shape: f32[8,2], index: 1, kind: input, shape index: {}]
  %s2 = inlined_call_operand.vmem [shape: f32[16,3], index: 2, kind: input, shape index: {}]
  %s3 = inlined_call_operand.vmem [shape: f32[6,16,8], index: 3, kind: input, shape index: {}]
  %s4 = inlined_call_operand.vmem [shape: f32[2,16,8], index: 4, kind: output, shape index: {}]
  %s5 = sld [smem:[#allocation0]]
  $region26: #{tpu_custom_call.1} parent=0
    _
  %s7 = ssub.s32 1, %s5
  %s8 = scalar_select 0, %s7, %s5
  // Predicated region
  $region2: #{tpu_custom_call.1} parent=0 // pred_check
    _
  $region3: #{tpu_custom_call.1} parent=0 // pred_check_branch
    %10 = sbr.rel (0) target = $region5
  $region4: #{tpu_custom_call.1} parent=0 // pred_region
    _
  $region5: #{tpu_custom_call.1} parent=0 // pred_fallthru
    _
  // Predicated region
  $region6: #{tpu_custom_call.1} parent=0 // pred_check
    _
  $region7: #{tpu_custom_call.1} parent=0 // pred_check_branch
    %12 = sbr.rel (0) target = $region9
  $region8: #{tpu_custom_call.1} parent=0 // pred_region
    _
  $region9: #{tpu_custom_call.1} parent=0 // pred_fallthru
    _
  // Predicated region
  $region10: #{tpu_custom_call.1} parent=0 // pred_check
    _
  $region11: #{tpu_custom_call.1} parent=0 // pred_check_branch
    %14 = sbr.rel (0) target = $region13
  $region12: #{tpu_custom_call.1} parent=0 // pred_region
    _
  $region13: #{tpu_custom_call.1} parent=0 // pred_fallthru
    _
  // Predicated region
  $region14: #{tpu_custom_call.1} parent=0 // pred_check
    _
  $region15: #{tpu_custom_call.1} parent=0 // pred_check_branch
    %16 = sbr.rel (0) target = $region17
  $region16: #{tpu_custom_call.1} parent=0 // pred_region
    _
  $region17: #{tpu_custom_call.1} parent=0 // pred_fallthru
    _
  %v17 = vld [vmem:[%s0] sm:$0xff]
  %vm18 = vcmask 130048
  %v19 = vsel %vm18, %v17, 0.0
  %20 = vadd.xlane.f32.xlu0 %v19
  %v21 = vpop.xlane.xlu0 %20
  %v22 = vadd.f32 %v21, 0.0
  %s23 = scalar_lea.vmem %s0, 8
  %v24 = vld [vmem:[%s23] sm:$0xff]
  %v25 = vsel %vm18, %v24, 0.0
  %26 = vadd.xlane.f32.xlu0 %v25
  %v27 = vpop.xlane.xlu0 %26
  %v28 = vadd.f32 %v22, %v27
  %v29 = vmul.f32 %v28, 0.03125
  %v30 = vsub.f32 %v17, %v29
  %v31 = vmul.f32 %v30, %v30
  %v32 = vsel %vm18, %v31, 0.0
  %33 = vadd.xlane.f32.xlu0 %v32
  %v34 = vpop.xlane.xlu0 %33
  %v35 = vadd.f32 %v34, 0.0
  %v36 = vsub.f32 %v24, %v29
  %v37 = vmul.f32 %v36, %v36
  %v38 = vsel %vm18, %v37, 0.0
  %39 = vadd.xlane.f32.xlu0 %v38
  %v40 = vpop.xlane.xlu0 %39
  %v41 = vadd.f32 %v35, %v40
  %v42 = vmul.f32 %v41, 0.03125
  %v43 = vld [vmem:[%s1] sm:$0xff]
  %v44 = vadd.f32 %v42, 1e-05
  %v45 = vrsqrt.pop %v44
  %v46 = vmul.f32 %v43, %v45
  %v47 = vmul.f32 %v29, %v46
  %49 = vrot.lane.b32.xlu0 %v47, 1
  %v50 = vpop.permute.xlu0 %49
  %v52 = vsub.f32 %v43, %v50
  %v53 = vld [vmem:[%s2] sm:$0xff]
  %v54 = vld [vmem:[%s2 + $0x8] sm:$0xff]
  %v55 = vld [vmem:[%s3] sm:$0xff]
  %v56 = vld [vmem:[%s3 + $0x8] sm:$0xff]
  %s57 = scalar_lea.vmem %s3, 16
  %v58 = vld [vmem:[%s57] sm:$0xff]
  %v59 = vld [vmem:[%s57 + $0x8] sm:$0xff]
  %s60 = scalar_lea.vmem %s3, 32
  %v61 = vld [vmem:[%s60] sm:$0xff]
  %v62 = vld [vmem:[%s60 + $0x8] sm:$0xff]
  %s63 = scalar_lea.vmem %s3, 48
  %v64 = vld [vmem:[%s63] sm:$0xff]
  %v65 = vld [vmem:[%s63 + $0x8] sm:$0xff]
  %s66 = scalar_lea.vmem %s3, 64
  %v67 = vld [vmem:[%s66] sm:$0xff]
  %v68 = vld [vmem:[%s66 + $0x8] sm:$0xff]
  %s69 = scalar_lea.vmem %s3, 80
  %v70 = vld [vmem:[%s69] sm:$0xff]
  %v71 = vld [vmem:[%s69 + $0x8] sm:$0xff]
  %73 = vset.pattern.permute.xlu0 0
  %74 = vperm.xlu0 %73, %v46
  %v75 = vpop.permute.xlu0 %74
  %v77 = vmul.f32 %v17, %v75
  %79 = vset.pattern.permute.xlu0 1
  %80 = vperm.xlu0 %79, %v52
  %v81 = vpop.permute.xlu0 %80
  %v83 = vadd.f32 %v77, %v81
  %v84 = vmax.f32 %v83, 0.0
  %v86 = vrot.slane %v84, 7
  %v88 = vrot.slane %v84, 6
  %v90 = vrot.slane %v84, 5
  %v92 = vrot.slane %v84, 4
  %v94 = vrot.slane %v84, 3
  %v96 = vrot.slane %v84, 2
  %v98 = vrot.slane %v84, 1
  %vm100 = vcmask 1040384
  %v101 = vsel %vm100, %v84, %v86
  %vm102 = vcmask 1041408
  %v103 = vsel %vm102, %v101, %v86
  %vm104 = vcmask 1042432
  %v105 = vsel %vm104, %v103, %v88
  %vm106 = vcmask 1043456
  %v107 = vsel %vm106, %v105, %v88
  %vm108 = vcmask 1044480
  %v109 = vsel %vm108, %v107, %v90
  %vm110 = vcmask 1045504
  %v111 = vsel %vm110, %v109, %v90
  %vm112 = vcmask 1046528
  %v113 = vsel %vm112, %v111, %v92
  %v114 = vsel %vm100, %v92, %v94
  %v115 = vsel %vm102, %v114, %v94
  %v116 = vsel %vm104, %v115, %v96
  %v117 = vsel %vm106, %v116, %v96
  %v118 = vsel %vm108, %v117, %v98
  %v119 = vsel %vm110, %v118, %v98
  %v120 = vsel %vm112, %v119, %v84
  %122 = vset.pattern.permute.xlu0 0
  %123 = vperm.xlu0 %122, %v53
  %v124 = vpop.permute.xlu0 %123
  %127 = vset.pattern.permute.xlu0 0
  %128 = vperm.xlu0 %127, %v54
  %v129 = vpop.permute.xlu0 %128
  %v131 = vmul.f32 %v113, %v124
  %v132 = vmul.f32 %v120, %v129
  %133 = vset.pattern.permute.xlu0 1
  %134 = vperm.xlu0 %133, %v53
  %v135 = vpop.permute.xlu0 %134
  %137 = vset.pattern.permute.xlu0 1
  %138 = vperm.xlu0 %137, %v54
  %v139 = vpop.permute.xlu0 %138
  %v141 = vmul.f32 %v113, %v135
  %v142 = vmul.f32 %v120, %v139
  %143 = vset.pattern.permute.xlu0 2
  %144 = vperm.xlu0 %143, %v53
  %v145 = vpop.permute.xlu0 %144
  %147 = vset.pattern.permute.xlu0 2
  %148 = vperm.xlu0 %147, %v54
  %v149 = vpop.permute.xlu0 %148
  %v151 = vmul.f32 %v113, %v145
  %v152 = vmul.f32 %v120, %v149
  %vm153 = vcmask 31744
  %v155 = vsel %vm153, %v131, 0
  %v158 = vsel %vm153, %v132, 0
  %v161 = vsel %vm153, %v141, 0
  %v164 = vsel %vm153, %v142, 0
  %166 = vmatprep.subr.mxu0 0.0
  %167 = vmatpush1.xpose.msra.mxu0 0.0
  %168 = vmatprep.subr.mxu0 0.0
  %169 = vmatpush1.xpose.msra.mxu0 0.0
  %170 = vmatprep.subr.mxu0 0.0
  %171 = vmatpush1.xpose.msra.mxu0 0.0
  %172 = vmatprep.subr.mxu0 0.0
  %173 = vmatpush1.xpose.msra.mxu0 0.0
  %174 = vmatprep.subr.mxu0 0.0
  %175 = vmatpush1.xpose.msra.mxu0 0.0
  %176 = vmatprep.subr.mxu0 0.0
  %177 = vmatpush1.xpose.msra.mxu0 0.0
  %178 = vmatprep.subr.mxu0 0.0
  %179 = vmatpush1.xpose.msra.mxu0 0.0
  %180 = vmatprep.subr.mxu0 0.0
  %181 = vmatpush1.xpose.msra.mxu0 0.0
  %182 = vmatprep.subr.mxu0 0.0
  %183 = vmatpush1.xpose.msra.mxu0 0.0
  %184 = vmatprep.subr.mxu0 0.0
  %185 = vmatpush1.xpose.msra.mxu0 0.0
  %186 = vmatprep.subr.mxu0 0.0
  %187 = vmatpush1.xpose.msra.mxu0 0.0
  %188 = vmatprep.subr.mxu0 0.0
  %189 = vmatpush1.xpose.msra.mxu0 0.0
  %190 = vmatprep.subr.mxu0 0.0
  %191 = vmatpush1.xpose.msra.mxu0 0.0
  %192 = vmatprep.subr.mxu0 0.0
  %193 = vmatpush1.xpose.msra.mxu0 0.0
  %194 = vmatprep.subr.mxu0 0.0
  %195 = vmatpush1.xpose.msra.mxu0 %v164
  %196 = vmatprep.subr.mxu0 0.0
  %197 = vmatpush1.xpose.msra.mxu0 %v161
  %198 = vmatprep.subr.mxu0 0.0
  %199 = vmatpush2.xpose.msra.mxu0 0.0
  %200 = vmatprep.subr.mxu0 0.0
  %201 = vmatpush2.xpose.msra.mxu0 0.0
  %202 = vmatprep.subr.mxu0 0.0
  %203 = vmatpush2.xpose.msra.mxu0 0.0
  %204 = vmatprep.subr.mxu0 0.0
  %205 = vmatpush2.xpose.msra.mxu0 0.0
  %206 = vmatprep.subr.mxu0 0.0
  %207 = vmatpush2.xpose.msra.mxu0 0.0
  %208 = vmatprep.subr.mxu0 0.0
  %209 = vmatpush2.xpose.msra.mxu0 0.0
  %210 = vmatprep.subr.mxu0 0.0
  %211 = vmatpush2.xpose.msra.mxu0 0.0
  %212 = vmatprep.subr.mxu0 0.0
  %213 = vmatpush2.xpose.msra.mxu0 0.0
  %214 = vmatprep.subr.mxu0 0.0
  %215 = vmatpush2.xpose.msra.mxu0 0.0
  %216 = vmatprep.subr.mxu0 0.0
  %217 = vmatpush2.xpose.msra.mxu0 0.0
  %218 = vmatprep.subr.mxu0 0.0
  %219 = vmatpush2.xpose.msra.mxu0 0.0
  %220 = vmatprep.subr.mxu0 0.0
  %221 = vmatpush2.xpose.msra.mxu0 0.0
  %222 = vmatprep.subr.mxu0 0.0
  %223 = vmatpush2.xpose.msra.mxu0 0.0
  %224 = vmatprep.subr.mxu0 0.0
  %225 = vmatpush2.xpose.msra.mxu0 0.0
  %226 = vmatprep.subr.mxu0 0.0
  %227 = vmatpush2.xpose.msra.mxu0 0.0
  %228 = vmatprep.subr.mxu0 0.0
  %229 = vmatpush2.xpose.msra.mxu0 0.0
  %230 = vmatprep.mubr.f32.mxu0 0.0
  %231 = vmatmul.mubr.f32.gmra.mxu0 %v155
  %v232 = vpop.f32.mrf.mxu0
  %v233 = vadd.f32 0.0, %v232
  %v234 = vpop.f32.mrf.mxu0
  %235 = vmatprep.mubr.f32.mxu0 0.0
  %236 = vmatmul.mubr.f32.gmra.mxu0 %v158
  %v237 = vpop.f32.mrf.mxu0
  %v238 = vadd.f32 0.0, %v237
  %v239 = vpop.f32.mrf.mxu0
  %240 = vdwg.mxu0
  %v241 = vmul.f32 %v233, 0.5
  %v242 = vmul.f32 %v238, 0.5
  %v243 = vsel %vm18, %v241, -inf
  %244 = vmax.xlane.f32.xlu0 %v243
  %v245 = vpop.xlane.xlu0 %244
  %v246 = vsel %vm18, %v242, -inf
  %247 = vmax.xlane.f32.xlu0 %v246
  %v248 = vpop.xlane.xlu0 %247
  %v249 = vsub.f32 %v241, %v245
  %v250 = vsub.f32 %v242, %v248
  %v251 = vmul.f32 %v249, 1.442695
  %v252 = vpow.pop %v251
  %v253 = vmul.f32 %v250, 1.442695
  %v254 = vpow.pop %v253
  %v255 = vsel %vm18, %v252, 0.0
  %256 = vadd.xlane.f32.xlu0 %v255
  %v257 = vpop.xlane.xlu0 %256
  %v258 = vsel %vm18, %v254, 0.0
  %259 = vadd.xlane.f32.xlu0 %v258
  %v260 = vpop.xlane.xlu0 %259
  %v261 = vrcp.pop %v257
  %v262 = vmul.f32 %v252, %v261
  %v263 = vrcp.pop %v260
  %v264 = vmul.f32 %v254, %v263
  %v266 = vsel %vm18, %v262, 0
  %v269 = vsel %vm18, %v264, 0
  %271 = vmatprep.subr.mxu0 0.0
  %272 = vmatpush1.msra.mxu0 0.0
  %273 = vmatprep.subr.mxu0 0.0
  %274 = vmatpush1.msra.mxu0 0.0
  %275 = vmatprep.subr.mxu0 0.0
  %276 = vmatpush1.msra.mxu0 0.0
  %277 = vmatprep.subr.mxu0 0.0
  %278 = vmatpush1.msra.mxu0 0.0
  %279 = vmatprep.subr.mxu0 0.0
  %280 = vmatpush1.msra.mxu0 0.0
  %281 = vmatprep.subr.mxu0 0.0
  %282 = vmatpush1.msra.mxu0 0.0
  %283 = vmatprep.subr.mxu0 0.0
  %284 = vmatpush1.msra.mxu0 0.0
  %285 = vmatprep.subr.mxu0 0.0
  %286 = vmatpush1.msra.mxu0 0.0
  %287 = vmatprep.subr.mxu0 0.0
  %288 = vmatpush1.msra.mxu0 0.0
  %289 = vmatprep.subr.mxu0 0.0
  %290 = vmatpush1.msra.mxu0 0.0
  %291 = vmatprep.subr.mxu0 0.0
  %292 = vmatpush1.msra.mxu0 0.0
  %293 = vmatprep.subr.mxu0 0.0
  %294 = vmatpush1.msra.mxu0 0.0
  %295 = vmatprep.subr.mxu0 0.0
  %296 = vmatpush1.msra.mxu0 0.0
  %297 = vmatprep.subr.mxu0 0.0
  %298 = vmatpush1.msra.mxu0 0.0
  %299 = vmatprep.subr.mxu0 0.0
  %300 = vmatpush1.msra.mxu0 %v152
  %301 = vmatprep.subr.mxu0 0.0
  %302 = vmatpush1.msra.mxu0 %v151
  %303 = vmatprep.subr.mxu0 0.0
  %304 = vmatpush2.msra.mxu0 0.0
  %305 = vmatprep.subr.mxu0 0.0
  %306 = vmatpush2.msra.mxu0 0.0
  %307 = vmatprep.subr.mxu0 0.0
  %308 = vmatpush2.msra.mxu0 0.0
  %309 = vmatprep.subr.mxu0 0.0
  %310 = vmatpush2.msra.mxu0 0.0
  %311 = vmatprep.subr.mxu0 0.0
  %312 = vmatpush2.msra.mxu0 0.0
  %313 = vmatprep.subr.mxu0 0.0
  %314 = vmatpush2.msra.mxu0 0.0
  %315 = vmatprep.subr.mxu0 0.0
  %316 = vmatpush2.msra.mxu0 0.0
  %317 = vmatprep.subr.mxu0 0.0
  %318 = vmatpush2.msra.mxu0 0.0
  %319 = vmatprep.subr.mxu0 0.0
  %320 = vmatpush2.msra.mxu0 0.0
  %321 = vmatprep.subr.mxu0 0.0
  %322 = vmatpush2.msra.mxu0 0.0
  %323 = vmatprep.subr.mxu0 0.0
  %324 = vmatpush2.msra.mxu0 0.0
  %325 = vmatprep.subr.mxu0 0.0
  %326 = vmatpush2.msra.mxu0 0.0
  %327 = vmatprep.subr.mxu0 0.0
  %328 = vmatpush2.msra.mxu0 0.0
  %329 = vmatprep.subr.mxu0 0.0
  %330 = vmatpush2.msra.mxu0 0.0
  %331 = vmatprep.subr.mxu0 0.0
  %332 = vmatpush2.msra.mxu0 0.0
  %333 = vmatprep.subr.mxu0 0.0
  %334 = vmatpush2.msra.mxu0 0.0
  %335 = vmatprep.mubr.f32.mxu0 0.0
  %336 = vmatmul.mubr.f32.gmra.mxu0 %v266
  %v337 = vpop.f32.mrf.mxu0
  %v338 = vadd.f32 0.0, %v337
  %v339 = vpop.f32.mrf.mxu0
  %340 = vmatprep.mubr.f32.mxu0 0.0
  %341 = vmatmul.mubr.f32.gmra.mxu0 %v269
  %v342 = vpop.f32.mrf.mxu0
  %v343 = vadd.f32 0.0, %v342
  %v344 = vpop.f32.mrf.mxu0
  %345 = vdwg.mxu0
  %346 = vrot.lane.b32.xlu0 %v131, 124
  %v347 = vpop.permute.xlu0 %346
  %348 = vrot.lane.b32.xlu0 %v132, 124
  %v349 = vpop.permute.xlu0 %348
  %350 = vrot.lane.b32.xlu0 %v141, 124
  %v351 = vpop.permute.xlu0 %350
  %352 = vrot.lane.b32.xlu0 %v142, 124
  %v353 = vpop.permute.xlu0 %352
  %v354 = vsel %vm153, %v347, 0
  %v356 = vsel %vm153, %v349, 0
  %v358 = vsel %vm153, %v351, 0
  %v360 = vsel %vm153, %v353, 0
  %362 = vmatprep.subr.mxu0 0.0
  %363 = vmatpush1.xpose.msra.mxu0 0.0
  %364 = vmatprep.subr.mxu0 0.0
  %365 = vmatpush1.xpose.msra.mxu0 0.0
  %366 = vmatprep.subr.mxu0 0.0
  %367 = vmatpush1.xpose.msra.mxu0 0.0
  %368 = vmatprep.subr.mxu0 0.0
  %369 = vmatpush1.xpose.msra.mxu0 0.0
  %370 = vmatprep.subr.mxu0 0.0
  %371 = vmatpush1.xpose.msra.mxu0 0.0
  %372 = vmatprep.subr.mxu0 0.0
  %373 = vmatpush1.xpose.msra.mxu0 0.0
  %374 = vmatprep.subr.mxu0 0.0
  %375 = vmatpush1.xpose.msra.mxu0 0.0
  %376 = vmatprep.subr.mxu0 0.0
  %377 = vmatpush1.xpose.msra.mxu0 0.0
  %378 = vmatprep.subr.mxu0 0.0
  %379 = vmatpush1.xpose.msra.mxu0 0.0
  %380 = vmatprep.subr.mxu0 0.0
  %381 = vmatpush1.xpose.msra.mxu0 0.0
  %382 = vmatprep.subr.mxu0 0.0
  %383 = vmatpush1.xpose.msra.mxu0 0.0
  %384 = vmatprep.subr.mxu0 0.0
  %385 = vmatpush1.xpose.msra.mxu0 0.0
  %386 = vmatprep.subr.mxu0 0.0
  %387 = vmatpush1.xpose.msra.mxu0 0.0
  %388 = vmatprep.subr.mxu0 0.0
  %389 = vmatpush1.xpose.msra.mxu0 0.0
  %390 = vmatprep.subr.mxu0 0.0
  %391 = vmatpush1.xpose.msra.mxu0 %v360
  %392 = vmatprep.subr.mxu0 0.0
  %393 = vmatpush1.xpose.msra.mxu0 %v358
  %394 = vmatprep.subr.mxu0 0.0
  %395 = vmatpush2.xpose.msra.mxu0 0.0
  %396 = vmatprep.subr.mxu0 0.0
  %397 = vmatpush2.xpose.msra.mxu0 0.0
  %398 = vmatprep.subr.mxu0 0.0
  %399 = vmatpush2.xpose.msra.mxu0 0.0
  %400 = vmatprep.subr.mxu0 0.0
  %401 = vmatpush2.xpose.msra.mxu0 0.0
  %402 = vmatprep.subr.mxu0 0.0
  %403 = vmatpush2.xpose.msra.mxu0 0.0
  %404 = vmatprep.subr.mxu0 0.0
  %405 = vmatpush2.xpose.msra.mxu0 0.0
  %406 = vmatprep.subr.mxu0 0.0
  %407 = vmatpush2.xpose.msra.mxu0 0.0
  %408 = vmatprep.subr.mxu0 0.0
  %409 = vmatpush2.xpose.msra.mxu0 0.0
  %410 = vmatprep.subr.mxu0 0.0
  %411 = vmatpush2.xpose.msra.mxu0 0.0
  %412 = vmatprep.subr.mxu0 0.0
  %413 = vmatpush2.xpose.msra.mxu0 0.0
  %414 = vmatprep.subr.mxu0 0.0
  %415 = vmatpush2.xpose.msra.mxu0 0.0
  %416 = vmatprep.subr.mxu0 0.0
  %417 = vmatpush2.xpose.msra.mxu0 0.0
  %418 = vmatprep.subr.mxu0 0.0
  %419 = vmatpush2.xpose.msra.mxu0 0.0
  %420 = vmatprep.subr.mxu0 0.0
  %421 = vmatpush2.xpose.msra.mxu0 0.0
  %422 = vmatprep.subr.mxu0 0.0
  %423 = vmatpush2.xpose.msra.mxu0 0.0
  %424 = vmatprep.subr.mxu0 0.0
  %425 = vmatpush2.xpose.msra.mxu0 0.0
  %426 = vmatprep.mubr.f32.mxu0 0.0
  %427 = vmatmul.mubr.f32.gmra.mxu0 %v354
  %v428 = vpop.f32.mrf.mxu0
  %v429 = vadd.f32 0.0, %v428
  %v430 = vpop.f32.mrf.mxu0
  %431 = vmatprep.mubr.f32.mxu0 0.0
  %432 = vmatmul.mubr.f32.gmra.mxu0 %v356
  %v433 = vpop.f32.mrf.mxu0
  %v434 = vadd.f32 0.0, %v433
  %v435 = vpop.f32.mrf.mxu0
  %436 = vdwg.mxu0
  %v437 = vmul.f32 %v429, 0.5
  %v438 = vmul.f32 %v434, 0.5
  %v439 = vsel %vm18, %v437, -inf
  %440 = vmax.xlane.f32.xlu0 %v439
  %v441 = vpop.xlane.xlu0 %440
  %v442 = vsel %vm18, %v438, -inf
  %443 = vmax.xlane.f32.xlu0 %v442
  %v444 = vpop.xlane.xlu0 %443
  %v445 = vsub.f32 %v437, %v441
  %v446 = vsub.f32 %v438, %v444
  %v447 = vmul.f32 %v445, 1.442695
  %v448 = vpow.pop %v447
  %v449 = vmul.f32 %v446, 1.442695
  %v450 = vpow.pop %v449
  %v451 = vsel %vm18, %v448, 0.0
  %452 = vadd.xlane.f32.xlu0 %v451
  %v453 = vpop.xlane.xlu0 %452
  %v454 = vsel %vm18, %v450, 0.0
  %455 = vadd.xlane.f32.xlu0 %v454
  %v456 = vpop.xlane.xlu0 %455
  %v457 = vrcp.pop %v453
  %v458 = vmul.f32 %v448, %v457
  %v459 = vrcp.pop %v456
  %v460 = vmul.f32 %v450, %v459
  %463 = vrot.lane.b32.xlu0 %v151, 124
  %v464 = vpop.permute.xlu0 %463
  %465 = vrot.lane.b32.xlu0 %v152, 124
  %v466 = vpop.permute.xlu0 %465
  %v470 = vsel %vm18, %v458, 0
  %v473 = vsel %vm18, %v460, 0
  %475 = vmatprep.subr.mxu0 0.0
  %476 = vmatpush1.msra.mxu0 0.0
  %477 = vmatprep.subr.mxu0 0.0
  %478 = vmatpush1.msra.mxu0 0.0
  %479 = vmatprep.subr.mxu0 0.0
  %480 = vmatpush1.msra.mxu0 0.0
  %481 = vmatprep.subr.mxu0 0.0
  %482 = vmatpush1.msra.mxu0 0.0
  %483 = vmatprep.subr.mxu0 0.0
  %484 = vmatpush1.msra.mxu0 0.0
  %485 = vmatprep.subr.mxu0 0.0
  %486 = vmatpush1.msra.mxu0 0.0
  %487 = vmatprep.subr.mxu0 0.0
  %488 = vmatpush1.msra.mxu0 0.0
  %489 = vmatprep.subr.mxu0 0.0
  %490 = vmatpush1.msra.mxu0 0.0
  %491 = vmatprep.subr.mxu0 0.0
  %492 = vmatpush1.msra.mxu0 0.0
  %493 = vmatprep.subr.mxu0 0.0
  %494 = vmatpush1.msra.mxu0 0.0
  %495 = vmatprep.subr.mxu0 0.0
  %496 = vmatpush1.msra.mxu0 0.0
  %497 = vmatprep.subr.mxu0 0.0
  %498 = vmatpush1.msra.mxu0 0.0
  %499 = vmatprep.subr.mxu0 0.0
  %500 = vmatpush1.msra.mxu0 0.0
  %501 = vmatprep.subr.mxu0 0.0
  %502 = vmatpush1.msra.mxu0 0.0
  %503 = vmatprep.subr.mxu0 0.0
  %504 = vmatpush1.msra.mxu0 %v466
  %505 = vmatprep.subr.mxu0 0.0
  %506 = vmatpush1.msra.mxu0 %v464
  %507 = vmatprep.subr.mxu0 0.0
  %508 = vmatpush2.msra.mxu0 0.0
  %509 = vmatprep.subr.mxu0 0.0
  %510 = vmatpush2.msra.mxu0 0.0
  %511 = vmatprep.subr.mxu0 0.0
  %512 = vmatpush2.msra.mxu0 0.0
  %513 = vmatprep.subr.mxu0 0.0
  %514 = vmatpush2.msra.mxu0 0.0
  %515 = vmatprep.subr.mxu0 0.0
  %516 = vmatpush2.msra.mxu0 0.0
  %517 = vmatprep.subr.mxu0 0.0
  %518 = vmatpush2.msra.mxu0 0.0
  %519 = vmatprep.subr.mxu0 0.0
  %520 = vmatpush2.msra.mxu0 0.0
  %521 = vmatprep.subr.mxu0 0.0
  %522 = vmatpush2.msra.mxu0 0.0
  %523 = vmatprep.subr.mxu0 0.0
  %524 = vmatpush2.msra.mxu0 0.0
  %525 = vmatprep.subr.mxu0 0.0
  %526 = vmatpush2.msra.mxu0 0.0
  %527 = vmatprep.subr.mxu0 0.0
  %528 = vmatpush2.msra.mxu0 0.0
  %529 = vmatprep.subr.mxu0 0.0
  %530 = vmatpush2.msra.mxu0 0.0
  %531 = vmatprep.subr.mxu0 0.0
  %532 = vmatpush2.msra.mxu0 0.0
  %533 = vmatprep.subr.mxu0 0.0
  %534 = vmatpush2.msra.mxu0 0.0
  %535 = vmatprep.subr.mxu0 0.0
  %536 = vmatpush2.msra.mxu0 0.0
  %537 = vmatprep.subr.mxu0 0.0
  %538 = vmatpush2.msra.mxu0 0.0
  %539 = vmatprep.mubr.f32.mxu0 0.0
  %540 = vmatmul.mubr.f32.gmra.mxu0 %v470
  %v541 = vpop.f32.mrf.mxu0
  %v542 = vadd.f32 0.0, %v541
  %v543 = vpop.f32.mrf.mxu0
  %544 = vmatprep.mubr.f32.mxu0 0.0
  %545 = vmatmul.mubr.f32.gmra.mxu0 %v473
  %v546 = vpop.f32.mrf.mxu0
  %v547 = vadd.f32 0.0, %v546
  %v548 = vpop.f32.mrf.mxu0
  %549 = vdwg.mxu0
  %552 = vrot.lane.b32.xlu0 %v542, 4
  %v553 = vpop.permute.xlu0 %552
  %554 = vrot.lane.b32.xlu0 %v547, 4
  %v555 = vpop.permute.xlu0 %554
  %v558 = vsel %vm153, %v338, %v553
  %v559 = vsel %vm153, %v343, %v555
  %560 = vrot.lane.b32.xlu0 %v131, 121
  %v561 = vpop.permute.xlu0 %560
  %562 = vrot.lane.b32.xlu0 %v132, 121
  %v563 = vpop.permute.xlu0 %562
  %vm566 = vcmask 7168
  %v567 = vsel %vm566, 0.0, %v561
  %v568 = vsel %vm566, 0.0, %v563
  %569 = vrot.lane.b32.xlu0 %v131, 119
  %v570 = vpop.permute.xlu0 %569
  %571 = vrot.lane.b32.xlu0 %v132, 119
  %v572 = vpop.permute.xlu0 %571
  %vm575 = vcmask 56320
  %v576 = vsel %vm575, %v570, 0.0
  %v577 = vsel %vm575, %v572, 0.0
  %v578 = vrot.slane %v141, 7
  %v579 = vrot.slane %v142, 7
  %v580 = vsel %vm100, %v578, %v579
  %581 = vrot.lane.b32.xlu0 %v578, 120
  %v582 = vpop.permute.xlu0 %581
  %583 = vrot.lane.b32.xlu0 %v580, 120
  %v584 = vpop.permute.xlu0 %583
  %v587 = vsel %vm100, 0.0, %v582
  %v588 = vrot.slane %v141, 1
  %v589 = vrot.slane %v142, 1
  %v590 = vsel %vm112, %v588, %v589
  %v592 = vsel %vm112, %v589, 0.0
  %v593 = vmul.f32 %v55, %v567
  %v594 = vmul.f32 %v56, %v568
  %595 = vrot.lane.b32.xlu0 %v131, 120
  %v596 = vpop.permute.xlu0 %595
  %597 = vrot.lane.b32.xlu0 %v132, 120
  %v598 = vpop.permute.xlu0 %597
  %v601 = vmul.f32 %v58, %v596
  %v602 = vmul.f32 %v59, %v598
  %v603 = vadd.f32 %v593, %v601
  %v604 = vadd.f32 %v594, %v602
  %v605 = vmul.f32 %v61, %v576
  %v606 = vmul.f32 %v62, %v577
  %v607 = vadd.f32 %v603, %v605
  %v608 = vadd.f32 %v604, %v606
  %v609 = vmul.f32 %v64, %v587
  %v610 = vmul.f32 %v65, %v584
  %611 = vrot.lane.b32.xlu0 %v141, 120
  %v612 = vpop.permute.xlu0 %611
  %613 = vrot.lane.b32.xlu0 %v142, 120
  %v614 = vpop.permute.xlu0 %613
  %v617 = vmul.f32 %v67, %v612
  %v618 = vmul.f32 %v68, %v614
  %v619 = vadd.f32 %v609, %v617
  %v620 = vadd.f32 %v610, %v618
  %622 = vrot.lane.b32.xlu0 %v590, 120
  %v623 = vpop.permute.xlu0 %622
  %624 = vrot.lane.b32.xlu0 %v592, 120
  %v625 = vpop.permute.xlu0 %624
  %v628 = vmul.f32 %v70, %v623
  %v629 = vmul.f32 %v71, %v625
  %v630 = vadd.f32 %v619, %v628
  %v631 = vadd.f32 %v620, %v629
  %v632 = vadd.f32 %v607, %v630
  %v633 = vadd.f32 %v608, %v631
  %634 = vrot.lane.b32.xlu0 %v151, 120
  %v635 = vpop.permute.xlu0 %634
  %636 = vrot.lane.b32.xlu0 %v152, 120
  %v637 = vpop.permute.xlu0 %636
  %v640 = vadd.f32 %v632, %v635
  %v641 = vadd.f32 %v633, %v637
  %v643 = vrot.slane %v640, 1
  %v645 = vrot.slane %v640, 2
  %v647 = vrot.slane %v640, 3
  %v650 = vrot.slane %v641, 4
  %v652 = vrot.slane %v641, 5
  %v654 = vrot.slane %v641, 6
  %v656 = vrot.slane %v641, 7
  %v658 = vsel %vm100, %v640, %v643
  %v659 = vsel %vm102, %v658, %v645
  %v660 = vsel %vm104, %v659, %v647
  %v661 = vsel %vm106, %v660, %v650
  %v662 = vsel %vm108, %v661, %v652
  %v663 = vsel %vm110, %v662, %v654
  %v664 = vsel %vm112, %v663, %v656
  %v665 = vrot.slane %v640, 4
  %v667 = vsel %vm100, %v643, %v645
  %v668 = vsel %vm102, %v667, %v647
  %v669 = vsel %vm104, %v668, %v665
  %v670 = vsel %vm106, %v669, %v652
  %v671 = vsel %vm108, %v670, %v654
  %v672 = vsel %vm110, %v671, %v656
  %v673 = vsel %vm112, %v672, %v641
  %675 = vrot.lane.b32.xlu0 %v673, 4
  %v676 = vpop.permute.xlu0 %675
  %v678 = vsel %vm153, %v664, %v676
  %680 = vrot.lane.b32.xlu0 %v664, 124
  %v681 = vpop.permute.xlu0 %680
  %v683 = vsel %vm153, %v681, %v673
  %686 = vrot.lane.b32.xlu0 %v678, 8
  %v687 = vpop.permute.xlu0 %686
  %688 = vrot.lane.b32.xlu0 %v683, 8
  %v689 = vpop.permute.xlu0 %688
  %vm692 = vcmask 64512
  %v693 = vsel %vm692, %v558, %v687
  %v694 = vsel %vm692, %v559, %v689
  %697 = vrot.lane.b32.xlu0 %v693, 127
  %v698 = vpop.permute.xlu0 %697
  %699 = vrot.lane.b32.xlu0 %v694, 127
  %v700 = vpop.permute.xlu0 %699
  %v703 = vadd.f32 %v693, %v698
  %v704 = vadd.f32 %v694, %v700
  %v705 = vmul.f32 %v703, 0.5
  %v706 = vmul.f32 %v704, 0.5
  %709 = vrot.lane.b32.xlu0 %v705, 127
  %v710 = vpop.permute.xlu0 %709
  %711 = vrot.lane.b32.xlu0 %v706, 127
  %v712 = vpop.permute.xlu0 %711
  %715 = vrot.lane.b32.xlu0 %v705, 126
  %v716 = vpop.permute.xlu0 %715
  %717 = vrot.lane.b32.xlu0 %v706, 126
  %v718 = vpop.permute.xlu0 %717
  %721 = vrot.lane.b32.xlu0 %v705, 125
  %v722 = vpop.permute.xlu0 %721
  %723 = vrot.lane.b32.xlu0 %v706, 125
  %v724 = vpop.permute.xlu0 %723
  %727 = vrot.lane.b32.xlu0 %v705, 124
  %v728 = vpop.permute.xlu0 %727
  %729 = vrot.lane.b32.xlu0 %v706, 124
  %v730 = vpop.permute.xlu0 %729
  %733 = vrot.lane.b32.xlu0 %v705, 123
  %v734 = vpop.permute.xlu0 %733
  %735 = vrot.lane.b32.xlu0 %v706, 123
  %v736 = vpop.permute.xlu0 %735
  %739 = vrot.lane.b32.xlu0 %v705, 122
  %v740 = vpop.permute.xlu0 %739
  %741 = vrot.lane.b32.xlu0 %v706, 122
  %v742 = vpop.permute.xlu0 %741
  %745 = vrot.lane.b32.xlu0 %v705, 121
  %v746 = vpop.permute.xlu0 %745
  %747 = vrot.lane.b32.xlu0 %v706, 121
  %v748 = vpop.permute.xlu0 %747
  %v751 = vsel %vm566, %v705, %v710
  %v752 = vsel %vm566, %v706, %v712
  %vm753 = vcmask 15360
  %v754 = vsel %vm753, %v751, %v716
  %v755 = vsel %vm753, %v752, %v718
  %vm756 = vcmask 23552
  %v757 = vsel %vm756, %v754, %v722
  %v758 = vsel %vm756, %v755, %v724
  %v759 = vsel %vm153, %v757, %v728
  %v760 = vsel %vm153, %v758, %v730
  %vm761 = vcmask 39936
  %v762 = vsel %vm761, %v759, %v734
  %v763 = vsel %vm761, %v760, %v736
  %vm764 = vcmask 48128
  %v765 = vsel %vm764, %v762, %v740
  %v766 = vsel %vm764, %v763, %v742
  %v767 = vsel %vm575, %v765, %v746
  %v768 = vsel %vm575, %v766, %v748
  %769 = vst.msk [vmem:[%s4] sm:$0xff] %vm692, %v767
  %770 = vst.msk [vmem:[%s4 + $0x8] sm:$0xff] %vm692, %v768
  %v771 = vld [vmem:[%s23] sm:$0xff]
  %v772 = vmul.f32 %v771, %v75
  %v773 = vadd.f32 %v772, %v81
  %v774 = vmax.f32 %v773, 0.0
  %v776 = vrot.slane %v774, 7
  %v778 = vrot.slane %v774, 6
  %v780 = vrot.slane %v774, 5
  %v782 = vrot.slane %v774, 4
  %v784 = vrot.slane %v774, 3
  %v786 = vrot.slane %v774, 2
  %v788 = vrot.slane %v774, 1
  %v790 = vsel %vm100, %v774, %v776
  %v791 = vsel %vm102, %v790, %v776
  %v792 = vsel %vm104, %v791, %v778
  %v793 = vsel %vm106, %v792, %v778
  %v794 = vsel %vm108, %v793, %v780
  %v795 = vsel %vm110, %v794, %v780
  %v796 = vsel %vm112, %v795, %v782
  %v797 = vsel %vm100, %v782, %v784
  %v798 = vsel %vm102, %v797, %v784
  %v799 = vsel %vm104, %v798, %v786
  %v800 = vsel %vm106, %v799, %v786
  %v801 = vsel %vm108, %v800, %v788
  %v802 = vsel %vm110, %v801, %v788
  %v803 = vsel %vm112, %v802, %v774
  %v804 = vmul.f32 %v796, %v124
  %v805 = vmul.f32 %v803, %v129
  %v806 = vmul.f32 %v796, %v135
  %v807 = vmul.f32 %v803, %v139
  %v808 = vmul.f32 %v796, %v145
  %v809 = vmul.f32 %v803, %v149
  %v811 = vsel %vm153, %v804, 0
  %v814 = vsel %vm153, %v805, 0
  %v817 = vsel %vm153, %v806, 0
  %v820 = vsel %vm153, %v807, 0
  %822 = vmatprep.subr.mxu0 0.0
  %823 = vmatpush1.xpose.msra.mxu0 0.0
  %824 = vmatprep.subr.mxu0 0.0
  %825 = vmatpush1.xpose.msra.mxu0 0.0
  %826 = vmatprep.subr.mxu0 0.0
  %827 = vmatpush1.xpose.msra.mxu0 0.0
  %828 = vmatprep.subr.mxu0 0.0
  %829 = vmatpush1.xpose.msra.mxu0 0.0
  %830 = vmatprep.subr.mxu0 0.0
  %831 = vmatpush1.xpose.msra.mxu0 0.0
  %832 = vmatprep.subr.mxu0 0.0
  %833 = vmatpush1.xpose.msra.mxu0 0.0
  %834 = vmatprep.subr.mxu0 0.0
  %835 = vmatpush1.xpose.msra.mxu0 0.0
  %836 = vmatprep.subr.mxu0 0.0
  %837 = vmatpush1.xpose.msra.mxu0 0.0
  %838 = vmatprep.subr.mxu0 0.0
  %839 = vmatpush1.xpose.msra.mxu0 0.0
  %840 = vmatprep.subr.mxu0 0.0
  %841 = vmatpush1.xpose.msra.mxu0 0.0
  %842 = vmatprep.subr.mxu0 0.0
  %843 = vmatpush1.xpose.msra.mxu0 0.0
  %844 = vmatprep.subr.mxu0 0.0
  %845 = vmatpush1.xpose.msra.mxu0 0.0
  %846 = vmatprep.subr.mxu0 0.0
  %847 = vmatpush1.xpose.msra.mxu0 0.0
  %848 = vmatprep.subr.mxu0 0.0
  %849 = vmatpush1.xpose.msra.mxu0 0.0
  %850 = vmatprep.subr.mxu0 0.0
  %851 = vmatpush1.xpose.msra.mxu0 %v820
  %852 = vmatprep.subr.mxu0 0.0
  %853 = vmatpush1.xpose.msra.mxu0 %v817
  %854 = vmatprep.subr.mxu0 0.0
  %855 = vmatpush2.xpose.msra.mxu0 0.0
  %856 = vmatprep.subr.mxu0 0.0
  %857 = vmatpush2.xpose.msra.mxu0 0.0
  %858 = vmatprep.subr.mxu0 0.0
  %859 = vmatpush2.xpose.msra.mxu0 0.0
  %860 = vmatprep.subr.mxu0 0.0
  %861 = vmatpush2.xpose.msra.mxu0 0.0
  %862 = vmatprep.subr.mxu0 0.0
  %863 = vmatpush2.xpose.msra.mxu0 0.0
  %864 = vmatprep.subr.mxu0 0.0
  %865 = vmatpush2.xpose.msra.mxu0 0.0
  %866 = vmatprep.subr.mxu0 0.0
  %867 = vmatpush2.xpose.msra.mxu0 0.0
  %868 = vmatprep.subr.mxu0 0.0
  %869 = vmatpush2.xpose.msra.mxu0 0.0
  %870 = vmatprep.subr.mxu0 0.0
  %871 = vmatpush2.xpose.msra.mxu0 0.0
  %872 = vmatprep.subr.mxu0 0.0
  %873 = vmatpush2.xpose.msra.mxu0 0.0
  %874 = vmatprep.subr.mxu0 0.0
  %875 = vmatpush2.xpose.msra.mxu0 0.0
  %876 = vmatprep.subr.mxu0 0.0
  %877 = vmatpush2.xpose.msra.mxu0 0.0
  %878 = vmatprep.subr.mxu0 0.0
  %879 = vmatpush2.xpose.msra.mxu0 0.0
  %880 = vmatprep.subr.mxu0 0.0
  %881 = vmatpush2.xpose.msra.mxu0 0.0
  %882 = vmatprep.subr.mxu0 0.0
  %883 = vmatpush2.xpose.msra.mxu0 0.0
  %884 = vmatprep.subr.mxu0 0.0
  %885 = vmatpush2.xpose.msra.mxu0 0.0
  %886 = vmatprep.mubr.f32.mxu0 0.0
  %887 = vmatmul.mubr.f32.gmra.mxu0 %v811
  %v888 = vpop.f32.mrf.mxu0
  %v889 = vadd.f32 0.0, %v888
  %v890 = vpop.f32.mrf.mxu0
  %891 = vmatprep.mubr.f32.mxu0 0.0
  %892 = vmatmul.mubr.f32.gmra.mxu0 %v814
  %v893 = vpop.f32.mrf.mxu0
  %v894 = vadd.f32 0.0, %v893
  %v895 = vpop.f32.mrf.mxu0
  %896 = vdwg.mxu0
  %v897 = vmul.f32 %v889, 0.5
  %v898 = vmul.f32 %v894, 0.5
  %v899 = vsel %vm18, %v897, -inf
  %900 = vmax.xlane.f32.xlu0 %v899
  %v901 = vpop.xlane.xlu0 %900
  %v902 = vsel %vm18, %v898, -inf
  %903 = vmax.xlane.f32.xlu0 %v902
  %v904 = vpop.xlane.xlu0 %903
  %v905 = vsub.f32 %v897, %v901
  %v906 = vsub.f32 %v898, %v904
  %v907 = vmul.f32 %v905, 1.442695
  %v908 = vpow.pop %v907
  %v909 = vmul.f32 %v906, 1.442695
  %v910 = vpow.pop %v909
  %v911 = vsel %vm18, %v908, 0.0
  %912 = vadd.xlane.f32.xlu0 %v911
  %v913 = vpop.xlane.xlu0 %912
  %v914 = vsel %vm18, %v910, 0.0
  %915 = vadd.xlane.f32.xlu0 %v914
  %v916 = vpop.xlane.xlu0 %915
  %v917 = vrcp.pop %v913
  %v918 = vmul.f32 %v908, %v917
  %v919 = vrcp.pop %v916
  %v920 = vmul.f32 %v910, %v919
  %v922 = vsel %vm18, %v918, 0
  %v925 = vsel %vm18, %v920, 0
  %927 = vmatprep.subr.mxu0 0.0
  %928 = vmatpush1.msra.mxu0 0.0
  %929 = vmatprep.subr.mxu0 0.0
  %930 = vmatpush1.msra.mxu0 0.0
  %931 = vmatprep.subr.mxu0 0.0
  %932 = vmatpush1.msra.mxu0 0.0
  %933 = vmatprep.subr.mxu0 0.0
  %934 = vmatpush1.msra.mxu0 0.0
  %935 = vmatprep.subr.mxu0 0.0
  %936 = vmatpush1.msra.mxu0 0.0
  %937 = vmatprep.subr.mxu0 0.0
  %938 = vmatpush1.msra.mxu0 0.0
  %939 = vmatprep.subr.mxu0 0.0
  %940 = vmatpush1.msra.mxu0 0.0
  %941 = vmatprep.subr.mxu0 0.0
  %942 = vmatpush1.msra.mxu0 0.0
  %943 = vmatprep.subr.mxu0 0.0
  %944 = vmatpush1.msra.mxu0 0.0
  %945 = vmatprep.subr.mxu0 0.0
  %946 = vmatpush1.msra.mxu0 0.0
  %947 = vmatprep.subr.mxu0 0.0
  %948 = vmatpush1.msra.mxu0 0.0
  %949 = vmatprep.subr.mxu0 0.0
  %950 = vmatpush1.msra.mxu0 0.0
  %951 = vmatprep.subr.mxu0 0.0
  %952 = vmatpush1.msra.mxu0 0.0
  %953 = vmatprep.subr.mxu0 0.0
  %954 = vmatpush1.msra.mxu0 0.0
  %955 = vmatprep.subr.mxu0 0.0
  %956 = vmatpush1.msra.mxu0 %v809
  %957 = vmatprep.subr.mxu0 0.0
  %958 = vmatpush1.msra.mxu0 %v808
  %959 = vmatprep.subr.mxu0 0.0
  %960 = vmatpush2.msra.mxu0 0.0
  %961 = vmatprep.subr.mxu0 0.0
  %962 = vmatpush2.msra.mxu0 0.0
  %963 = vmatprep.subr.mxu0 0.0
  %964 = vmatpush2.msra.mxu0 0.0
  %965 = vmatprep.subr.mxu0 0.0
  %966 = vmatpush2.msra.mxu0 0.0
  %967 = vmatprep.subr.mxu0 0.0
  %968 = vmatpush2.msra.mxu0 0.0
  %969 = vmatprep.subr.mxu0 0.0
  %970 = vmatpush2.msra.mxu0 0.0
  %971 = vmatprep.subr.mxu0 0.0
  %972 = vmatpush2.msra.mxu0 0.0
  %973 = vmatprep.subr.mxu0 0.0
  %974 = vmatpush2.msra.mxu0 0.0
  %975 = vmatprep.subr.mxu0 0.0
  %976 = vmatpush2.msra.mxu0 0.0
  %977 = vmatprep.subr.mxu0 0.0
  %978 = vmatpush2.msra.mxu0 0.0
  %979 = vmatprep.subr.mxu0 0.0
  %980 = vmatpush2.msra.mxu0 0.0
  %981 = vmatprep.subr.mxu0 0.0
  %982 = vmatpush2.msra.mxu0 0.0
  %983 = vmatprep.subr.mxu0 0.0
  %984 = vmatpush2.msra.mxu0 0.0
  %985 = vmatprep.subr.mxu0 0.0
  %986 = vmatpush2.msra.mxu0 0.0
  %987 = vmatprep.subr.mxu0 0.0
  %988 = vmatpush2.msra.mxu0 0.0
  %989 = vmatprep.subr.mxu0 0.0
  %990 = vmatpush2.msra.mxu0 0.0
  %991 = vmatprep.mubr.f32.mxu0 0.0
  %992 = vmatmul.mubr.f32.gmra.mxu0 %v922
  %v993 = vpop.f32.mrf.mxu0
  %v994 = vadd.f32 0.0, %v993
  %v995 = vpop.f32.mrf.mxu0
  %996 = vmatprep.mubr.f32.mxu0 0.0
  %997 = vmatmul.mubr.f32.gmra.mxu0 %v925
  %v998 = vpop.f32.mrf.mxu0
  %v999 = vadd.f32 0.0, %v998
  %v1000 = vpop.f32.mrf.mxu0
  %1001 = vdwg.mxu0
  %1002 = vrot.lane.b32.xlu0 %v804, 124
  %v1003 = vpop.permute.xlu0 %1002
  %1004 = vrot.lane.b32.xlu0 %v805, 124
  %v1005 = vpop.permute.xlu0 %1004
  %1006 = vrot.lane.b32.xlu0 %v806, 124
  %v1007 = vpop.permute.xlu0 %1006
  %1008 = vrot.lane.b32.xlu0 %v807, 124
  %v1009 = vpop.permute.xlu0 %1008
  %v1010 = vsel %vm153, %v1003, 0
  %v1012 = vsel %vm153, %v1005, 0
  %v1014 = vsel %vm153, %v1007, 0
  %v1016 = vsel %vm153, %v1009, 0
  %1018 = vmatprep.subr.mxu0 0.0
  %1019 = vmatpush1.xpose.msra.mxu0 0.0
  %1020 = vmatprep.subr.mxu0 0.0
  %1021 = vmatpush1.xpose.msra.mxu0 0.0
  %1022 = vmatprep.subr.mxu0 0.0
  %1023 = vmatpush1.xpose.msra.mxu0 0.0
  %1024 = vmatprep.subr.mxu0 0.0
  %1025 = vmatpush1.xpose.msra.mxu0 0.0
  %1026 = vmatprep.subr.mxu0 0.0
  %1027 = vmatpush1.xpose.msra.mxu0 0.0
  %1028 = vmatprep.subr.mxu0 0.0
  %1029 = vmatpush1.xpose.msra.mxu0 0.0
  %1030 = vmatprep.subr.mxu0 0.0
  %1031 = vmatpush1.xpose.msra.mxu0 0.0
  %1032 = vmatprep.subr.mxu0 0.0
  %1033 = vmatpush1.xpose.msra.mxu0 0.0
  %1034 = vmatprep.subr.mxu0 0.0
  %1035 = vmatpush1.xpose.msra.mxu0 0.0
  %1036 = vmatprep.subr.mxu0 0.0
  %1037 = vmatpush1.xpose.msra.mxu0 0.0
  %1038 = vmatprep.subr.mxu0 0.0
  %1039 = vmatpush1.xpose.msra.mxu0 0.0
  %1040 = vmatprep.subr.mxu0 0.0
  %1041 = vmatpush1.xpose.msra.mxu0 0.0
  %1042 = vmatprep.subr.mxu0 0.0
  %1043 = vmatpush1.xpose.msra.mxu0 0.0
  %1044 = vmatprep.subr.mxu0 0.0
  %1045 = vmatpush1.xpose.msra.mxu0 0.0
  %1046 = vmatprep.subr.mxu0 0.0
  %1047 = vmatpush1.xpose.msra.mxu0 %v1016
  %1048 = vmatprep.subr.mxu0 0.0
  %1049 = vmatpush1.xpose.msra.mxu0 %v1014
  %1050 = vmatprep.subr.mxu0 0.0
  %1051 = vmatpush2.xpose.msra.mxu0 0.0
  %1052 = vmatprep.subr.mxu0 0.0
  %1053 = vmatpush2.xpose.msra.mxu0 0.0
  %1054 = vmatprep.subr.mxu0 0.0
  %1055 = vmatpush2.xpose.msra.mxu0 0.0
  %1056 = vmatprep.subr.mxu0 0.0
  %1057 = vmatpush2.xpose.msra.mxu0 0.0
  %1058 = vmatprep.subr.mxu0 0.0
  %1059 = vmatpush2.xpose.msra.mxu0 0.0
  %1060 = vmatprep.subr.mxu0 0.0
  %1061 = vmatpush2.xpose.msra.mxu0 0.0
  %1062 = vmatprep.subr.mxu0 0.0
  %1063 = vmatpush2.xpose.msra.mxu0 0.0
  %1064 = vmatprep.subr.mxu0 0.0
  %1065 = vmatpush2.xpose.msra.mxu0 0.0
  %1066 = vmatprep.subr.mxu0 0.0
  %1067 = vmatpush2.xpose.msra.mxu0 0.0
  %1068 = vmatprep.subr.mxu0 0.0
  %1069 = vmatpush2.xpose.msra.mxu0 0.0
  %1070 = vmatprep.subr.mxu0 0.0
  %1071 = vmatpush2.xpose.msra.mxu0 0.0
  %1072 = vmatprep.subr.mxu0 0.0
  %1073 = vmatpush2.xpose.msra.mxu0 0.0
  %1074 = vmatprep.subr.mxu0 0.0
  %1075 = vmatpush2.xpose.msra.mxu0 0.0
  %1076 = vmatprep.subr.mxu0 0.0
  %1077 = vmatpush2.xpose.msra.mxu0 0.0
  %1078 = vmatprep.subr.mxu0 0.0
  %1079 = vmatpush2.xpose.msra.mxu0 0.0
  %1080 = vmatprep.subr.mxu0 0.0
  %1081 = vmatpush2.xpose.msra.mxu0 0.0
  %1082 = vmatprep.mubr.f32.mxu0 0.0
  %1083 = vmatmul.mubr.f32.gmra.mxu0 %v1010
  %v1084 = vpop.f32.mrf.mxu0
  %v1085 = vadd.f32 0.0, %v1084
  %v1086 = vpop.f32.mrf.mxu0
  %1087 = vmatprep.mubr.f32.mxu0 0.0
  %1088 = vmatmul.mubr.f32.gmra.mxu0 %v1012
  %v1089 = vpop.f32.mrf.mxu0
  %v1090 = vadd.f32 0.0, %v1089
  %v1091 = vpop.f32.mrf.mxu0
  %1092 = vdwg.mxu0
  %v1093 = vmul.f32 %v1085, 0.5
  %v1094 = vmul.f32 %v1090, 0.5
  %v1095 = vsel %vm18, %v1093, -inf
  %1096 = vmax.xlane.f32.xlu0 %v1095
  %v1097 = vpop.xlane.xlu0 %1096
  %v1098 = vsel %vm18, %v1094, -inf
  %1099 = vmax.xlane.f32.xlu0 %v1098
  %v1100 = vpop.xlane.xlu0 %1099
  %v1101 = vsub.f32 %v1093, %v1097
  %v1102 = vsub.f32 %v1094, %v1100
  %v1103 = vmul.f32 %v1101, 1.442695
  %v1104 = vpow.pop %v1103
  %v1105 = vmul.f32 %v1102, 1.442695
  %v1106 = vpow.pop %v1105
  %v1107 = vsel %vm18, %v1104, 0.0
  %1108 = vadd.xlane.f32.xlu0 %v1107
  %v1109 = vpop.xlane.xlu0 %1108
  %v1110 = vsel %vm18, %v1106, 0.0
  %1111 = vadd.xlane.f32.xlu0 %v1110
  %v1112 = vpop.xlane.xlu0 %1111
  %v1113 = vrcp.pop %v1109
  %v1114 = vmul.f32 %v1104, %v1113
  %v1115 = vrcp.pop %v1112
  %v1116 = vmul.f32 %v1106, %v1115
  %1119 = vrot.lane.b32.xlu0 %v808, 124
  %v1120 = vpop.permute.xlu0 %1119
  %1121 = vrot.lane.b32.xlu0 %v809, 124
  %v1122 = vpop.permute.xlu0 %1121
  %v1126 = vsel %vm18, %v1114, 0
  %v1129 = vsel %vm18, %v1116, 0
  %1131 = vmatprep.subr.mxu0 0.0
  %1132 = vmatpush1.msra.mxu0 0.0
  %1133 = vmatprep.subr.mxu0 0.0
  %1134 = vmatpush1.msra.mxu0 0.0
  %1135 = vmatprep.subr.mxu0 0.0
  %1136 = vmatpush1.msra.mxu0 0.0
  %1137 = vmatprep.subr.mxu0 0.0
  %1138 = vmatpush1.msra.mxu0 0.0
  %1139 = vmatprep.subr.mxu0 0.0
  %1140 = vmatpush1.msra.mxu0 0.0
  %1141 = vmatprep.subr.mxu0 0.0
  %1142 = vmatpush1.msra.mxu0 0.0
  %1143 = vmatprep.subr.mxu0 0.0
  %1144 = vmatpush1.msra.mxu0 0.0
  %1145 = vmatprep.subr.mxu0 0.0
  %1146 = vmatpush1.msra.mxu0 0.0
  %1147 = vmatprep.subr.mxu0 0.0
  %1148 = vmatpush1.msra.mxu0 0.0
  %1149 = vmatprep.subr.mxu0 0.0
  %1150 = vmatpush1.msra.mxu0 0.0
  %1151 = vmatprep.subr.mxu0 0.0
  %1152 = vmatpush1.msra.mxu0 0.0
  %1153 = vmatprep.subr.mxu0 0.0
  %1154 = vmatpush1.msra.mxu0 0.0
  %1155 = vmatprep.subr.mxu0 0.0
  %1156 = vmatpush1.msra.mxu0 0.0
  %1157 = vmatprep.subr.mxu0 0.0
  %1158 = vmatpush1.msra.mxu0 0.0
  %1159 = vmatprep.subr.mxu0 0.0
  %1160 = vmatpush1.msra.mxu0 %v1122
  %1161 = vmatprep.subr.mxu0 0.0
  %1162 = vmatpush1.msra.mxu0 %v1120
  %1163 = vmatprep.subr.mxu0 0.0
  %1164 = vmatpush2.msra.mxu0 0.0
  %1165 = vmatprep.subr.mxu0 0.0
  %1166 = vmatpush2.msra.mxu0 0.0
  %1167 = vmatprep.subr.mxu0 0.0
  %1168 = vmatpush2.msra.mxu0 0.0
  %1169 = vmatprep.subr.mxu0 0.0
  %1170 = vmatpush2.msra.mxu0 0.0
  %1171 = vmatprep.subr.mxu0 0.0
  %1172 = vmatpush2.msra.mxu0 0.0
  %1173 = vmatprep.subr.mxu0 0.0
  %1174 = vmatpush2.msra.mxu0 0.0
  %1175 = vmatprep.subr.mxu0 0.0
  %1176 = vmatpush2.msra.mxu0 0.0
  %1177 = vmatprep.subr.mxu0 0.0
  %1178 = vmatpush2.msra.mxu0 0.0
  %1179 = vmatprep.subr.mxu0 0.0
  %1180 = vmatpush2.msra.mxu0 0.0
  %1181 = vmatprep.subr.mxu0 0.0
  %1182 = vmatpush2.msra.mxu0 0.0
  %1183 = vmatprep.subr.mxu0 0.0
  %1184 = vmatpush2.msra.mxu0 0.0
  %1185 = vmatprep.subr.mxu0 0.0
  %1186 = vmatpush2.msra.mxu0 0.0
  %1187 = vmatprep.subr.mxu0 0.0
  %1188 = vmatpush2.msra.mxu0 0.0
  %1189 = vmatprep.subr.mxu0 0.0
  %1190 = vmatpush2.msra.mxu0 0.0
  %1191 = vmatprep.subr.mxu0 0.0
  %1192 = vmatpush2.msra.mxu0 0.0
  %1193 = vmatprep.subr.mxu0 0.0
  %1194 = vmatpush2.msra.mxu0 0.0
  %1195 = vmatprep.mubr.f32.mxu0 0.0
  %1196 = vmatmul.mubr.f32.gmra.mxu0 %v1126
  %v1197 = vpop.f32.mrf.mxu0
  %v1198 = vadd.f32 0.0, %v1197
  %v1199 = vpop.f32.mrf.mxu0
  %1200 = vmatprep.mubr.f32.mxu0 0.0
  %1201 = vmatmul.mubr.f32.gmra.mxu0 %v1129
  %v1202 = vpop.f32.mrf.mxu0
  %v1203 = vadd.f32 0.0, %v1202
  %v1204 = vpop.f32.mrf.mxu0
  %1205 = vdwg.mxu0
  %1208 = vrot.lane.b32.xlu0 %v1198, 4
  %v1209 = vpop.permute.xlu0 %1208
  %1210 = vrot.lane.b32.xlu0 %v1203, 4
  %v1211 = vpop.permute.xlu0 %1210
  %v1214 = vsel %vm153, %v994, %v1209
  %v1215 = vsel %vm153, %v999, %v1211
  %1216 = vrot.lane.b32.xlu0 %v804, 121
  %v1217 = vpop.permute.xlu0 %1216
  %1218 = vrot.lane.b32.xlu0 %v805, 121
  %v1219 = vpop.permute.xlu0 %1218
  %v1222 = vsel %vm566, 0.0, %v1217
  %v1223 = vsel %vm566, 0.0, %v1219
  %1224 = vrot.lane.b32.xlu0 %v804, 119
  %v1225 = vpop.permute.xlu0 %1224
  %1226 = vrot.lane.b32.xlu0 %v805, 119
  %v1227 = vpop.permute.xlu0 %1226
  %v1230 = vsel %vm575, %v1225, 0.0
  %v1231 = vsel %vm575, %v1227, 0.0
  %v1232 = vrot.slane %v806, 7
  %v1233 = vrot.slane %v807, 7
  %v1234 = vsel %vm100, %v1232, %v1233
  %1235 = vrot.lane.b32.xlu0 %v1232, 120
  %v1236 = vpop.permute.xlu0 %1235
  %1237 = vrot.lane.b32.xlu0 %v1234, 120
  %v1238 = vpop.permute.xlu0 %1237
  %v1241 = vsel %vm100, 0.0, %v1236
  %v1242 = vrot.slane %v806, 1
  %v1243 = vrot.slane %v807, 1
  %v1244 = vsel %vm112, %v1242, %v1243
  %v1246 = vsel %vm112, %v1243, 0.0
  %v1247 = vmul.f32 %v55, %v1222
  %v1248 = vmul.f32 %v56, %v1223
  %1249 = vrot.lane.b32.xlu0 %v804, 120
  %v1250 = vpop.permute.xlu0 %1249
  %1251 = vrot.lane.b32.xlu0 %v805, 120
  %v1252 = vpop.permute.xlu0 %1251
  %v1255 = vmul.f32 %v58, %v1250
  %v1256 = vmul.f32 %v59, %v1252
  %v1257 = vadd.f32 %v1247, %v1255
  %v1258 = vadd.f32 %v1248, %v1256
  %v1259 = vmul.f32 %v61, %v1230
  %v1260 = vmul.f32 %v62, %v1231
  %v1261 = vadd.f32 %v1257, %v1259
  %v1262 = vadd.f32 %v1258, %v1260
  %v1263 = vmul.f32 %v64, %v1241
  %v1264 = vmul.f32 %v65, %v1238
  %1265 = vrot.lane.b32.xlu0 %v806, 120
  %v1266 = vpop.permute.xlu0 %1265
  %1267 = vrot.lane.b32.xlu0 %v807, 120
  %v1268 = vpop.permute.xlu0 %1267
  %v1271 = vmul.f32 %v67, %v1266
  %v1272 = vmul.f32 %v68, %v1268
  %v1273 = vadd.f32 %v1263, %v1271
  %v1274 = vadd.f32 %v1264, %v1272
  %1276 = vrot.lane.b32.xlu0 %v1244, 120
  %v1277 = vpop.permute.xlu0 %1276
  %1278 = vrot.lane.b32.xlu0 %v1246, 120
  %v1279 = vpop.permute.xlu0 %1278
  %v1282 = vmul.f32 %v70, %v1277
  %v1283 = vmul.f32 %v71, %v1279
  %v1284 = vadd.f32 %v1273, %v1282
  %v1285 = vadd.f32 %v1274, %v1283
  %v1286 = vadd.f32 %v1261, %v1284
  %v1287 = vadd.f32 %v1262, %v1285
  %1288 = vrot.lane.b32.xlu0 %v808, 120
  %v1289 = vpop.permute.xlu0 %1288
  %1290 = vrot.lane.b32.xlu0 %v809, 120
  %v1291 = vpop.permute.xlu0 %1290
  %v1294 = vadd.f32 %v1286, %v1289
  %v1295 = vadd.f32 %v1287, %v1291
  %v1297 = vrot.slane %v1294, 1
  %v1299 = vrot.slane %v1294, 2
  %v1301 = vrot.slane %v1294, 3
  %v1304 = vrot.slane %v1295, 4
  %v1306 = vrot.slane %v1295, 5
  %v1308 = vrot.slane %v1295, 6
  %v1310 = vrot.slane %v1295, 7
  %v1312 = vsel %vm100, %v1294, %v1297
  %v1313 = vsel %vm102, %v1312, %v1299
  %v1314 = vsel %vm104, %v1313, %v1301
  %v1315 = vsel %vm106, %v1314, %v1304
  %v1316 = vsel %vm108, %v1315, %v1306
  %v1317 = vsel %vm110, %v1316, %v1308
  %v1318 = vsel %vm112, %v1317, %v1310
  %v1319 = vrot.slane %v1294, 4
  %v1321 = vsel %vm100, %v1297, %v1299
  %v1322 = vsel %vm102, %v1321, %v1301
  %v1323 = vsel %vm104, %v1322, %v1319
  %v1324 = vsel %vm106, %v1323, %v1306
  %v1325 = vsel %vm108, %v1324, %v1308
  %v1326 = vsel %vm110, %v1325, %v1310
  %v1327 = vsel %vm112, %v1326, %v1295
  %1329 = vrot.lane.b32.xlu0 %v1327, 4
  %v1330 = vpop.permute.xlu0 %1329
  %v1332 = vsel %vm153, %v1318, %v1330
  %1334 = vrot.lane.b32.xlu0 %v1318, 124
  %v1335 = vpop.permute.xlu0 %1334
  %v1337 = vsel %vm153, %v1335, %v1327
  %1340 = vrot.lane.b32.xlu0 %v1332, 8
  %v1341 = vpop.permute.xlu0 %1340
  %1342 = vrot.lane.b32.xlu0 %v1337, 8
  %v1343 = vpop.permute.xlu0 %1342
  %v1346 = vsel %vm692, %v1214, %v1341
  %v1347 = vsel %vm692, %v1215, %v1343
  %1350 = vrot.lane.b32.xlu0 %v1346, 127
  %v1351 = vpop.permute.xlu0 %1350
  %1352 = vrot.lane.b32.xlu0 %v1347, 127
  %v1353 = vpop.permute.xlu0 %1352
  %v1356 = vadd.f32 %v1346, %v1351
  %v1357 = vadd.f32 %v1347, %v1353
  %v1358 = vmul.f32 %v1356, 0.5
  %v1359 = vmul.f32 %v1357, 0.5
  %1362 = vrot.lane.b32.xlu0 %v1358, 127
  %v1363 = vpop.permute.xlu0 %1362
  %1364 = vrot.lane.b32.xlu0 %v1359, 127
  %v1365 = vpop.permute.xlu0 %1364
  %1368 = vrot.lane.b32.xlu0 %v1358, 126
  %v1369 = vpop.permute.xlu0 %1368
  %1370 = vrot.lane.b32.xlu0 %v1359, 126
  %v1371 = vpop.permute.xlu0 %1370
  %1374 = vrot.lane.b32.xlu0 %v1358, 125
  %v1375 = vpop.permute.xlu0 %1374
  %1376 = vrot.lane.b32.xlu0 %v1359, 125
  %v1377 = vpop.permute.xlu0 %1376
  %1380 = vrot.lane.b32.xlu0 %v1358, 124
  %v1381 = vpop.permute.xlu0 %1380
  %1382 = vrot.lane.b32.xlu0 %v1359, 124
  %v1383 = vpop.permute.xlu0 %1382
  %1386 = vrot.lane.b32.xlu0 %v1358, 123
  %v1387 = vpop.permute.xlu0 %1386
  %1388 = vrot.lane.b32.xlu0 %v1359, 123
  %v1389 = vpop.permute.xlu0 %1388
  %1392 = vrot.lane.b32.xlu0 %v1358, 122
  %v1393 = vpop.permute.xlu0 %1392
  %1394 = vrot.lane.b32.xlu0 %v1359, 122
  %v1395 = vpop.permute.xlu0 %1394
  %1398 = vrot.lane.b32.xlu0 %v1358, 121
  %v1399 = vpop.permute.xlu0 %1398
  %1400 = vrot.lane.b32.xlu0 %v1359, 121
  %v1401 = vpop.permute.xlu0 %1400
  %v1404 = vsel %vm566, %v1358, %v1363
  %v1405 = vsel %vm566, %v1359, %v1365
  %v1406 = vsel %vm753, %v1404, %v1369
  %v1407 = vsel %vm753, %v1405, %v1371
  %v1408 = vsel %vm756, %v1406, %v1375
  %v1409 = vsel %vm756, %v1407, %v1377
  %v1410 = vsel %vm153, %v1408, %v1381
  %v1411 = vsel %vm153, %v1409, %v1383
  %v1412 = vsel %vm761, %v1410, %v1387
  %v1413 = vsel %vm761, %v1411, %v1389
  %v1414 = vsel %vm764, %v1412, %v1393
  %v1415 = vsel %vm764, %v1413, %v1395
  %v1416 = vsel %vm575, %v1414, %v1399
  %v1417 = vsel %vm575, %v1415, %v1401
  %s1418 = scalar_lea.vmem %s4, 16
  %1419 = vst.msk [vmem:[%s1418] sm:$0xff] %vm692, %v1416
  %1420 = vst.msk [vmem:[%s1418 + $0x8] sm:$0xff] %vm692, %v1417
  // Predicated region
  $region18: #{tpu_custom_call.1} parent=0 // pred_check
    _
  $region19: #{tpu_custom_call.1} parent=0 // pred_check_branch
    %1422 = sbr.rel (0) target = $region21
  $region20: #{tpu_custom_call.1} parent=0 // pred_region
    _
  $region21: #{tpu_custom_call.1} parent=0 // pred_fallthru
    _
  // Predicated region
  $region22: #{tpu_custom_call.1} parent=0 // pred_check
    _
  $region23: #{tpu_custom_call.1} parent=0 // pred_check_branch
    %1424 = sbr.rel (0) target = $region25
  $region24: #{tpu_custom_call.1} parent=0 // pred_region
    _
  $region25: #{tpu_custom_call.1} parent=0 // pred_fallthru
    _

</llo_original>
